<compile_context>
chip_gen: v7x
topology: tpu7x:2x2x1
jax: 0.10.0
libtpu: 0.0.40
codegen_flags: <defaults>
</compile_context>

<pallas_src>
import jax
import jax.numpy as jnp
import numpy as np
from jax import lax
from jax.experimental import pallas as pl
from jax.experimental.pallas import tpu as pltpu


# ------------------------------ helpers ------------------------------------ #

def _conv_taps():
    # t = kh*3 + kw  ->  (sy, sx) = (kh-1, kw-1)
    return [(t // 3 - 1, t % 3 - 1) for t in range(9)]


def _build_border_mask(H, W, C, B):
    """(9*C, B*H*W) f32 mask: 1 where the tap's source pixel lies inside its image."""
    HW = H * W
    p = np.arange(HW)
    row, col = p // W, p % W
    blocks = []
    for (sy, sx) in _conv_taps():
        m = np.ones(HW, dtype=np.float32)
        if sy == -1:
            m = m * (row >= 1)
        if sy == 1:
            m = m * (row <= H - 2)
        if sx == -1:
            m = m * (col >= 1)
        if sx == 1:
            m = m * (col <= W - 2)
        blocks.append(np.broadcast_to(m[None, :], (C, HW)))
    mask = np.concatenate(blocks, axis=0)   # (9*C, HW)
    mask = np.tile(mask, (1, B))            # repeat per lane-packed image
    return jnp.asarray(mask, dtype=jnp.float32)


def _pick_lane_pack(n_images):
    # Pack B images along the lane axis per grid step, but keep >= 2 grid steps
    # when possible so both v7x TensorCores get work (v5e/v6e unaffected).
    for b in (4, 2):
        if n_images % b == 0 and n_images // b >= 2:
            return b
    return 1


# ----------------------------- Pallas kernel -------------------------------- #

def _make_group_kernel(H, W, C, B):
    """Fused kernel for the whole RecursiveResidualGroup (6 convs, 2 residuals)."""
    HW = H * W
    LW = B * HW
    TAPS = _conv_taps()

    def kernel(x_ref, w_ref, b_ref, m_ref, o_ref):
        # x_ref: (C, LW)      activation, channels on sublanes, B*H*W on lanes
        # w_ref: (6, C, 9*C)  per-conv stacked (C_out, 9*C_in) weights
        # b_ref: (C, 6)       per-conv bias, conv index on lanes (single tile)
        # m_ref: (9*C, LW)    f32 border mask (precomputed, resident)
        # o_ref: (C, LW)
        x0 = x_ref[...].astype(jnp.float32)
        mask = m_ref[...]

        def stacked_taps(h):
            # Build (9*C, LW): tap t rows = h rolled so row q holds h[:, q + sa],
            # then zero every lane whose source pixel falls outside its image.
            parts = []
            for (sy, sx) in TAPS:
                sa = sy * W + sx
                if sa == 0:
                    parts.append(h)
                else:
                    parts.append(pltpu.roll(h, shift=(-sa) % LW, axis=1))
            return jnp.concatenate(parts, axis=0) * mask

        def conv(h, idx, relu):
            # Single K=9*C matmul per conv (idx is a Python int -> static slices).
            y = jnp.dot(w_ref[idx], stacked_taps(h),
                        preferred_element_type=jnp.float32)
            y = y + b_ref[:, idx:idx + 1]
            if relu:
                y = jnp.maximum(y, 0.0)
            return y

        # DAB1
        h = conv(x0, 0, True)
        h = conv(h, 1, True)
        d1 = conv(h, 2, False) + x0
        # DAB2 + outer residual
        h = conv(d1, 3, True)
        h = conv(h, 4, True)
        out = conv(h, 5, False) + d1 + x0

        o_ref[...] = out.astype(o_ref.dtype)

    return kernel


# --------------------------- Module forward pass ---------------------------- #

def recursive_residual_group(x_nchw, params):
    """Pallas implementation of RecursiveResidualGroup.forward (NCHW in/out)."""
    N, C, H, W = x_nchw.shape
    HW = H * W
    B = _pick_lane_pack(N)
    G = N // B
    LW = B * HW

    # Repack weights for the stacked matmul: w_all[c] is (C_out, 9*C_in) with
    # column block t = kh*3 + kw holding weight[:, :, kh, kw].
    w_list, b_list = [], []
    for dab in ("dab1", "dab2"):
        for i in (1, 2, 3):
            w = params[dab][f"w{i}"]                              # (C_out, C_in, 3, 3)
            w_taps = jnp.transpose(w, (2, 3, 0, 1)).reshape(9, C, C)
            w_list.append(jnp.transpose(w_taps, (1, 0, 2)).reshape(C, 9 * C))
            b_list.append(params[dab][f"b{i}"])
    w_all = jnp.stack(w_list)                                     # (6, C, 9*C)
    b_all = jnp.stack(b_list, axis=1)                             # (C, 6)

    mask = _build_border_mask(H, W, C, B)                         # (9*C, LW)

    # Pack B images along the lane axis: (G, C, B*HW).
    x_packed = (x_nchw.reshape(G, B, C, HW)
                .transpose(0, 2, 1, 3)
                .reshape(G, C, LW))

    kernel = _make_group_kernel(H, W, C, B)

    out = pl.pallas_call(
        kernel,
        grid=(G,),
        in_specs=[
            pl.BlockSpec((None, C, LW), lambda g: (g, 0, 0)),     # activation tile
            pl.BlockSpec((6, C, 9 * C), lambda g: (0, 0, 0)),     # weights (resident)
            pl.BlockSpec((C, 6), lambda g: (0, 0)),               # biases (resident)
            pl.BlockSpec((9 * C, LW), lambda g: (0, 0)),          # border mask (resident)
        ],
        out_specs=pl.BlockSpec((None, C, LW), lambda g: (g, 0, 0)),
        out_shape=jax.ShapeDtypeStruct((G, C, LW), x_nchw.dtype),
        compiler_params=pltpu.CompilerParams(
            dimension_semantics=("parallel",)),
    )(x_packed, w_all, b_all, mask)

    return (out.reshape(G, C, B, HW)
            .transpose(0, 2, 1, 3)
            .reshape(N, C, H, W))


# --------------------------- Reference (pure JAX) --------------------------- #

def _conv_ref(x_nhwc, w_oihw, b):
    w_hwio = jnp.transpose(w_oihw, (2, 3, 1, 0))
    y = lax.conv_general_dilated(
        x_nhwc, w_hwio, window_strides=(1, 1), padding="SAME",
        dimension_numbers=("NHWC", "HWIO", "NHWC"))
    return y + b


def _dab_ref(x, p):
    h = jax.nn.relu(_conv_ref(x, p["w1"], p["b1"]))
    h = jax.nn.relu(_conv_ref(h, p["w2"], p["b2"]))
    return _conv_ref(h, p["w3"], p["b3"]) + x


def recursive_residual_group_ref(x_nchw, params):
    x = jnp.transpose(x_nchw, (0, 2, 3, 1))
    out = _dab_ref(x, params["dab1"])
    out = _dab_ref(out, params["dab2"])
    out = out + x
    return jnp.transpose(out, (0, 3, 1, 2))


# ---------------------------------- Main ------------------------------------ #

def _init_params(key, channels):
    params = {}
    for dab in ("dab1", "dab2"):
        p = {}
        for i in (1, 2, 3):
            key, kw, kb = jax.random.split(key, 3)
            p[f"w{i}"] = 0.1 * jax.random.normal(
                kw, (channels, channels, 3, 3), dtype=jnp.float32)
            p[f"b{i}"] = 0.05 * jax.random.normal(kb, (channels,), dtype=jnp.float32)
        params[dab] = p
    return params


if __name__ == "__main__":
    key = jax.random.PRNGKey(0)
    key_x, key_x2, key_p = jax.random.split(key, 3)

    C, H, W = 4, 16, 16
    params = _init_params(key_p, C)

    # Primary shape from the module spec (B=1 per grid step, 2 parallel steps).
    x = jax.random.normal(key_x, (2, C, H, W), dtype=jnp.float32)
    out = jax.block_until_ready(recursive_residual_group(x, params))
    ref = jax.block_until_ready(recursive_residual_group_ref(x, params))
    assert out.shape == x.shape, out.shape
    np.testing.assert_allclose(np.asarray(out), np.asarray(ref), rtol=1e-4, atol=1e-4)

    # Larger batch to exercise the lane-packing path (B=2 images per grid step).
    x2 = jax.random.normal(key_x2, (4, C, H, W), dtype=jnp.float32)
    out2 = jax.block_until_ready(recursive_residual_group(x2, params))
    ref2 = jax.block_until_ready(recursive_residual_group_ref(x2, params))
    np.testing.assert_allclose(np.asarray(out2), np.asarray(ref2), rtol=1e-4, atol=1e-4)

    print("KERNEL_OK")
</pallas_src>

<mosaic_0001>
module attributes {stable_mosaic.version = 11 : i64} {
  func.func @kernel(%arg0: i32, %arg1: memref<1x4x256xf32, #tpu.memory_space<vmem>>, %arg2: memref<6x4x36xf32, #tpu.memory_space<vmem>>, %arg3: memref<4x6xf32, #tpu.memory_space<vmem>>, %arg4: memref<36x256xf32, #tpu.memory_space<vmem>>, %arg5: memref<1x4x256xf32, #tpu.memory_space<vmem>>) attributes {dimension_semantics = [#tpu.dimension_semantics<parallel>], iteration_bounds = array<i64: 2>, scalar_prefetch = 0 : i64, scratch_operands = 0 : i64, tpu.core_type = #tpu.core_type<tc>, window_params = [{transform_indices = @transform_0, window_bounds = array<i64: 1, 4, 256>}, {pipeline_mode = #tpu.pipeline_mode<synchronous>, transform_indices = @transform_1, window_bounds = array<i64: 6, 4, 36>}, {pipeline_mode = #tpu.pipeline_mode<synchronous>, transform_indices = @transform_2, window_bounds = array<i64: 4, 6>}, {pipeline_mode = #tpu.pipeline_mode<synchronous>, transform_indices = @transform_3, window_bounds = array<i64: 36, 256>}, {transform_indices = @transform_4, window_bounds = array<i64: 1, 4, 256>}]} {
    %c0 = arith.constant 0 : index
    %c0_0 = arith.constant 0 : index
    %c0_1 = arith.constant 0 : index
    %0 = vector.load %arg1[%c0, %c0_0, %c0_1] : memref<1x4x256xf32, #tpu.memory_space<vmem>>, vector<1x4x256xf32>
    %1 = vector.shape_cast %0 : vector<1x4x256xf32> to vector<4x256xf32>
    %c0_2 = arith.constant 0 : index
    %c0_3 = arith.constant 0 : index
    %2 = vector.load %arg4[%c0_2, %c0_3] : memref<36x256xf32, #tpu.memory_space<vmem>>, vector<36x256xf32>
    %c0_4 = arith.constant 0 : index
    %c0_5 = arith.constant 0 : index
    %c0_6 = arith.constant 0 : index
    %3 = vector.load %arg2[%c0_4, %c0_5, %c0_6] : memref<6x4x36xf32, #tpu.memory_space<vmem>>, vector<1x4x36xf32>
    %4 = vector.shape_cast %3 : vector<1x4x36xf32> to vector<4x36xf32>
    %c17_i32 = arith.constant 17 : i32
    %5 = tpu.dynamic_rotate %1 by %c17_i32 dim 1 : vector<4x256xf32>, i32 -> vector<4x256xf32>
    %c16_i32 = arith.constant 16 : i32
    %6 = tpu.dynamic_rotate %1 by %c16_i32 dim 1 : vector<4x256xf32>, i32 -> vector<4x256xf32>
    %c15_i32 = arith.constant 15 : i32
    %7 = tpu.dynamic_rotate %1 by %c15_i32 dim 1 : vector<4x256xf32>, i32 -> vector<4x256xf32>
    %c1_i32 = arith.constant 1 : i32
    %8 = tpu.dynamic_rotate %1 by %c1_i32 dim 1 : vector<4x256xf32>, i32 -> vector<4x256xf32>
    %c255_i32 = arith.constant 255 : i32
    %9 = tpu.dynamic_rotate %1 by %c255_i32 dim 1 : vector<4x256xf32>, i32 -> vector<4x256xf32>
    %c241_i32 = arith.constant 241 : i32
    %10 = tpu.dynamic_rotate %1 by %c241_i32 dim 1 : vector<4x256xf32>, i32 -> vector<4x256xf32>
    %c240_i32 = arith.constant 240 : i32
    %11 = tpu.dynamic_rotate %1 by %c240_i32 dim 1 : vector<4x256xf32>, i32 -> vector<4x256xf32>
    %c239_i32 = arith.constant 239 : i32
    %12 = tpu.dynamic_rotate %1 by %c239_i32 dim 1 : vector<4x256xf32>, i32 -> vector<4x256xf32>
    %13 = tpu.concatenate %5, %6, %7, %8, %1, %9, %10, %11, %12 in 0 : vector<4x256xf32>, vector<4x256xf32>, vector<4x256xf32>, vector<4x256xf32>, vector<4x256xf32>, vector<4x256xf32>, vector<4x256xf32>, vector<4x256xf32>, vector<4x256xf32> -> vector<36x256xf32>
    %14 = arith.mulf %13, %2 : vector<36x256xf32>
    %cst = arith.constant dense<0.000000e+00> : vector<4x256xf32>
    %15 = tpu.matmul %4, %14, %cst {dimension_numbers = #tpu.dot_dimension_numbers<[1], [0], [0], [1], [0, 0, 1, 1], [], []>} : vector<4x36xf32>, vector<36x256xf32>, vector<4x256xf32> -> vector<4x256xf32>
    %c0_7 = arith.constant 0 : index
    %c0_8 = arith.constant 0 : index
    %16 = vector.load %arg3[%c0_7, %c0_8] : memref<4x6xf32, #tpu.memory_space<vmem>>, vector<4x1xf32>
    %17 = vector.broadcast %16 : vector<4x1xf32> to vector<4x256xf32>
    %18 = arith.addf %15, %17 : vector<4x256xf32>
    %cst_9 = arith.constant 0.000000e+00 : f32
    %19 = vector.broadcast %cst_9 : f32 to vector<4x256xf32>
    %20 = arith.maximumf %18, %19 : vector<4x256xf32>
    %c1 = arith.constant 1 : index
    %c0_10 = arith.constant 0 : index
    %c0_11 = arith.constant 0 : index
    %21 = vector.load %arg2[%c1, %c0_10, %c0_11] : memref<6x4x36xf32, #tpu.memory_space<vmem>>, vector<1x4x36xf32>
    %22 = vector.shape_cast %21 : vector<1x4x36xf32> to vector<4x36xf32>
    %c17_i32_12 = arith.constant 17 : i32
    %23 = tpu.dynamic_rotate %20 by %c17_i32_12 dim 1 : vector<4x256xf32>, i32 -> vector<4x256xf32>
    %c16_i32_13 = arith.constant 16 : i32
    %24 = tpu.dynamic_rotate %20 by %c16_i32_13 dim 1 : vector<4x256xf32>, i32 -> vector<4x256xf32>
    %c15_i32_14 = arith.constant 15 : i32
    %25 = tpu.dynamic_rotate %20 by %c15_i32_14 dim 1 : vector<4x256xf32>, i32 -> vector<4x256xf32>
    %c1_i32_15 = arith.constant 1 : i32
    %26 = tpu.dynamic_rotate %20 by %c1_i32_15 dim 1 : vector<4x256xf32>, i32 -> vector<4x256xf32>
    %c255_i32_16 = arith.constant 255 : i32
    %27 = tpu.dynamic_rotate %20 by %c255_i32_16 dim 1 : vector<4x256xf32>, i32 -> vector<4x256xf32>
    %c241_i32_17 = arith.constant 241 : i32
    %28 = tpu.dynamic_rotate %20 by %c241_i32_17 dim 1 : vector<4x256xf32>, i32 -> vector<4x256xf32>
    %c240_i32_18 = arith.constant 240 : i32
    %29 = tpu.dynamic_rotate %20 by %c240_i32_18 dim 1 : vector<4x256xf32>, i32 -> vector<4x256xf32>
    %c239_i32_19 = arith.constant 239 : i32
    %30 = tpu.dynamic_rotate %20 by %c239_i32_19 dim 1 : vector<4x256xf32>, i32 -> vector<4x256xf32>
    %31 = tpu.concatenate %23, %24, %25, %26, %20, %27, %28, %29, %30 in 0 : vector<4x256xf32>, vector<4x256xf32>, vector<4x256xf32>, vector<4x256xf32>, vector<4x256xf32>, vector<4x256xf32>, vector<4x256xf32>, vector<4x256xf32>, vector<4x256xf32> -> vector<36x256xf32>
    %32 = arith.mulf %31, %2 : vector<36x256xf32>
    %cst_20 = arith.constant dense<0.000000e+00> : vector<4x256xf32>
    %33 = tpu.matmul %22, %32, %cst_20 {dimension_numbers = #tpu.dot_dimension_numbers<[1], [0], [0], [1], [0, 0, 1, 1], [], []>} : vector<4x36xf32>, vector<36x256xf32>, vector<4x256xf32> -> vector<4x256xf32>
    %c0_21 = arith.constant 0 : index
    %c1_22 = arith.constant 1 : index
    %34 = vector.load %arg3[%c0_21, %c1_22] : memref<4x6xf32, #tpu.memory_space<vmem>>, vector<4x1xf32>
    %35 = vector.broadcast %34 : vector<4x1xf32> to vector<4x256xf32>
    %36 = arith.addf %33, %35 : vector<4x256xf32>
    %cst_23 = arith.constant 0.000000e+00 : f32
    %37 = vector.broadcast %cst_23 : f32 to vector<4x256xf32>
    %38 = arith.maximumf %36, %37 : vector<4x256xf32>
    %c2 = arith.constant 2 : index
    %c0_24 = arith.constant 0 : index
    %c0_25 = arith.constant 0 : index
    %39 = vector.load %arg2[%c2, %c0_24, %c0_25] : memref<6x4x36xf32, #tpu.memory_space<vmem>>, vector<1x4x36xf32>
    %40 = vector.shape_cast %39 : vector<1x4x36xf32> to vector<4x36xf32>
    %c17_i32_26 = arith.constant 17 : i32
    %41 = tpu.dynamic_rotate %38 by %c17_i32_26 dim 1 : vector<4x256xf32>, i32 -> vector<4x256xf32>
    %c16_i32_27 = arith.constant 16 : i32
    %42 = tpu.dynamic_rotate %38 by %c16_i32_27 dim 1 : vector<4x256xf32>, i32 -> vector<4x256xf32>
    %c15_i32_28 = arith.constant 15 : i32
    %43 = tpu.dynamic_rotate %38 by %c15_i32_28 dim 1 : vector<4x256xf32>, i32 -> vector<4x256xf32>
    %c1_i32_29 = arith.constant 1 : i32
    %44 = tpu.dynamic_rotate %38 by %c1_i32_29 dim 1 : vector<4x256xf32>, i32 -> vector<4x256xf32>
    %c255_i32_30 = arith.constant 255 : i32
    %45 = tpu.dynamic_rotate %38 by %c255_i32_30 dim 1 : vector<4x256xf32>, i32 -> vector<4x256xf32>
    %c241_i32_31 = arith.constant 241 : i32
    %46 = tpu.dynamic_rotate %38 by %c241_i32_31 dim 1 : vector<4x256xf32>, i32 -> vector<4x256xf32>
    %c240_i32_32 = arith.constant 240 : i32
    %47 = tpu.dynamic_rotate %38 by %c240_i32_32 dim 1 : vector<4x256xf32>, i32 -> vector<4x256xf32>
    %c239_i32_33 = arith.constant 239 : i32
    %48 = tpu.dynamic_rotate %38 by %c239_i32_33 dim 1 : vector<4x256xf32>, i32 -> vector<4x256xf32>
    %49 = tpu.concatenate %41, %42, %43, %44, %38, %45, %46, %47, %48 in 0 : vector<4x256xf32>, vector<4x256xf32>, vector<4x256xf32>, vector<4x256xf32>, vector<4x256xf32>, vector<4x256xf32>, vector<4x256xf32>, vector<4x256xf32>, vector<4x256xf32> -> vector<36x256xf32>
    %50 = arith.mulf %49, %2 : vector<36x256xf32>
    %cst_34 = arith.constant dense<0.000000e+00> : vector<4x256xf32>
    %51 = tpu.matmul %40, %50, %cst_34 {dimension_numbers = #tpu.dot_dimension_numbers<[1], [0], [0], [1], [0, 0, 1, 1], [], []>} : vector<4x36xf32>, vector<36x256xf32>, vector<4x256xf32> -> vector<4x256xf32>
    %c0_35 = arith.constant 0 : index
    %c2_36 = arith.constant 2 : index
    %52 = vector.load %arg3[%c0_35, %c2_36] : memref<4x6xf32, #tpu.memory_space<vmem>>, vector<4x1xf32>
    %53 = vector.broadcast %52 : vector<4x1xf32> to vector<4x256xf32>
    %54 = arith.addf %51, %53 : vector<4x256xf32>
    %55 = arith.addf %54, %1 : vector<4x256xf32>
    %c3 = arith.constant 3 : index
    %c0_37 = arith.constant 0 : index
    %c0_38 = arith.constant 0 : index
    %56 = vector.load %arg2[%c3, %c0_37, %c0_38] : memref<6x4x36xf32, #tpu.memory_space<vmem>>, vector<1x4x36xf32>
    %57 = vector.shape_cast %56 : vector<1x4x36xf32> to vector<4x36xf32>
    %c17_i32_39 = arith.constant 17 : i32
    %58 = tpu.dynamic_rotate %55 by %c17_i32_39 dim 1 : vector<4x256xf32>, i32 -> vector<4x256xf32>
    %c16_i32_40 = arith.constant 16 : i32
    %59 = tpu.dynamic_rotate %55 by %c16_i32_40 dim 1 : vector<4x256xf32>, i32 -> vector<4x256xf32>
    %c15_i32_41 = arith.constant 15 : i32
    %60 = tpu.dynamic_rotate %55 by %c15_i32_41 dim 1 : vector<4x256xf32>, i32 -> vector<4x256xf32>
    %c1_i32_42 = arith.constant 1 : i32
    %61 = tpu.dynamic_rotate %55 by %c1_i32_42 dim 1 : vector<4x256xf32>, i32 -> vector<4x256xf32>
    %c255_i32_43 = arith.constant 255 : i32
    %62 = tpu.dynamic_rotate %55 by %c255_i32_43 dim 1 : vector<4x256xf32>, i32 -> vector<4x256xf32>
    %c241_i32_44 = arith.constant 241 : i32
    %63 = tpu.dynamic_rotate %55 by %c241_i32_44 dim 1 : vector<4x256xf32>, i32 -> vector<4x256xf32>
    %c240_i32_45 = arith.constant 240 : i32
    %64 = tpu.dynamic_rotate %55 by %c240_i32_45 dim 1 : vector<4x256xf32>, i32 -> vector<4x256xf32>
    %c239_i32_46 = arith.constant 239 : i32
    %65 = tpu.dynamic_rotate %55 by %c239_i32_46 dim 1 : vector<4x256xf32>, i32 -> vector<4x256xf32>
    %66 = tpu.concatenate %58, %59, %60, %61, %55, %62, %63, %64, %65 in 0 : vector<4x256xf32>, vector<4x256xf32>, vector<4x256xf32>, vector<4x256xf32>, vector<4x256xf32>, vector<4x256xf32>, vector<4x256xf32>, vector<4x256xf32>, vector<4x256xf32> -> vector<36x256xf32>
    %67 = arith.mulf %66, %2 : vector<36x256xf32>
    %cst_47 = arith.constant dense<0.000000e+00> : vector<4x256xf32>
    %68 = tpu.matmul %57, %67, %cst_47 {dimension_numbers = #tpu.dot_dimension_numbers<[1], [0], [0], [1], [0, 0, 1, 1], [], []>} : vector<4x36xf32>, vector<36x256xf32>, vector<4x256xf32> -> vector<4x256xf32>
    %c0_48 = arith.constant 0 : index
    %c3_49 = arith.constant 3 : index
    %69 = vector.load %arg3[%c0_48, %c3_49] : memref<4x6xf32, #tpu.memory_space<vmem>>, vector<4x1xf32>
    %70 = vector.broadcast %69 : vector<4x1xf32> to vector<4x256xf32>
    %71 = arith.addf %68, %70 : vector<4x256xf32>
    %cst_50 = arith.constant 0.000000e+00 : f32
    %72 = vector.broadcast %cst_50 : f32 to vector<4x256xf32>
    %73 = arith.maximumf %71, %72 : vector<4x256xf32>
    %c4 = arith.constant 4 : index
    %c0_51 = arith.constant 0 : index
    %c0_52 = arith.constant 0 : index
    %74 = vector.load %arg2[%c4, %c0_51, %c0_52] : memref<6x4x36xf32, #tpu.memory_space<vmem>>, vector<1x4x36xf32>
    %75 = vector.shape_cast %74 : vector<1x4x36xf32> to vector<4x36xf32>
    %c17_i32_53 = arith.constant 17 : i32
    %76 = tpu.dynamic_rotate %73 by %c17_i32_53 dim 1 : vector<4x256xf32>, i32 -> vector<4x256xf32>
    %c16_i32_54 = arith.constant 16 : i32
    %77 = tpu.dynamic_rotate %73 by %c16_i32_54 dim 1 : vector<4x256xf32>, i32 -> vector<4x256xf32>
    %c15_i32_55 = arith.constant 15 : i32
    %78 = tpu.dynamic_rotate %73 by %c15_i32_55 dim 1 : vector<4x256xf32>, i32 -> vector<4x256xf32>
    %c1_i32_56 = arith.constant 1 : i32
    %79 = tpu.dynamic_rotate %73 by %c1_i32_56 dim 1 : vector<4x256xf32>, i32 -> vector<4x256xf32>
    %c255_i32_57 = arith.constant 255 : i32
    %80 = tpu.dynamic_rotate %73 by %c255_i32_57 dim 1 : vector<4x256xf32>, i32 -> vector<4x256xf32>
    %c241_i32_58 = arith.constant 241 : i32
    %81 = tpu.dynamic_rotate %73 by %c241_i32_58 dim 1 : vector<4x256xf32>, i32 -> vector<4x256xf32>
    %c240_i32_59 = arith.constant 240 : i32
    %82 = tpu.dynamic_rotate %73 by %c240_i32_59 dim 1 : vector<4x256xf32>, i32 -> vector<4x256xf32>
    %c239_i32_60 = arith.constant 239 : i32
    %83 = tpu.dynamic_rotate %73 by %c239_i32_60 dim 1 : vector<4x256xf32>, i32 -> vector<4x256xf32>
    %84 = tpu.concatenate %76, %77, %78, %79, %73, %80, %81, %82, %83 in 0 : vector<4x256xf32>, vector<4x256xf32>, vector<4x256xf32>, vector<4x256xf32>, vector<4x256xf32>, vector<4x256xf32>, vector<4x256xf32>, vector<4x256xf32>, vector<4x256xf32> -> vector<36x256xf32>
    %85 = arith.mulf %84, %2 : vector<36x256xf32>
    %cst_61 = arith.constant dense<0.000000e+00> : vector<4x256xf32>
    %86 = tpu.matmul %75, %85, %cst_61 {dimension_numbers = #tpu.dot_dimension_numbers<[1], [0], [0], [1], [0, 0, 1, 1], [], []>} : vector<4x36xf32>, vector<36x256xf32>, vector<4x256xf32> -> vector<4x256xf32>
    %c0_62 = arith.constant 0 : index
    %c4_63 = arith.constant 4 : index
    %87 = vector.load %arg3[%c0_62, %c4_63] : memref<4x6xf32, #tpu.memory_space<vmem>>, vector<4x1xf32>
    %88 = vector.broadcast %87 : vector<4x1xf32> to vector<4x256xf32>
    %89 = arith.addf %86, %88 : vector<4x256xf32>
    %cst_64 = arith.constant 0.000000e+00 : f32
    %90 = vector.broadcast %cst_64 : f32 to vector<4x256xf32>
    %91 = arith.maximumf %89, %90 : vector<4x256xf32>
    %c5 = arith.constant 5 : index
    %c0_65 = arith.constant 0 : index
    %c0_66 = arith.constant 0 : index
    %92 = vector.load %arg2[%c5, %c0_65, %c0_66] : memref<6x4x36xf32, #tpu.memory_space<vmem>>, vector<1x4x36xf32>
    %93 = vector.shape_cast %92 : vector<1x4x36xf32> to vector<4x36xf32>
    %c17_i32_67 = arith.constant 17 : i32
    %94 = tpu.dynamic_rotate %91 by %c17_i32_67 dim 1 : vector<4x256xf32>, i32 -> vector<4x256xf32>
    %c16_i32_68 = arith.constant 16 : i32
    %95 = tpu.dynamic_rotate %91 by %c16_i32_68 dim 1 : vector<4x256xf32>, i32 -> vector<4x256xf32>
    %c15_i32_69 = arith.constant 15 : i32
    %96 = tpu.dynamic_rotate %91 by %c15_i32_69 dim 1 : vector<4x256xf32>, i32 -> vector<4x256xf32>
    %c1_i32_70 = arith.constant 1 : i32
    %97 = tpu.dynamic_rotate %91 by %c1_i32_70 dim 1 : vector<4x256xf32>, i32 -> vector<4x256xf32>
    %c255_i32_71 = arith.constant 255 : i32
    %98 = tpu.dynamic_rotate %91 by %c255_i32_71 dim 1 : vector<4x256xf32>, i32 -> vector<4x256xf32>
    %c241_i32_72 = arith.constant 241 : i32
    %99 = tpu.dynamic_rotate %91 by %c241_i32_72 dim 1 : vector<4x256xf32>, i32 -> vector<4x256xf32>
    %c240_i32_73 = arith.constant 240 : i32
    %100 = tpu.dynamic_rotate %91 by %c240_i32_73 dim 1 : vector<4x256xf32>, i32 -> vector<4x256xf32>
    %c239_i32_74 = arith.constant 239 : i32
    %101 = tpu.dynamic_rotate %91 by %c239_i32_74 dim 1 : vector<4x256xf32>, i32 -> vector<4x256xf32>
    %102 = tpu.concatenate %94, %95, %96, %97, %91, %98, %99, %100, %101 in 0 : vector<4x256xf32>, vector<4x256xf32>, vector<4x256xf32>, vector<4x256xf32>, vector<4x256xf32>, vector<4x256xf32>, vector<4x256xf32>, vector<4x256xf32>, vector<4x256xf32> -> vector<36x256xf32>
    %103 = arith.mulf %102, %2 : vector<36x256xf32>
    %cst_75 = arith.constant dense<0.000000e+00> : vector<4x256xf32>
    %104 = tpu.matmul %93, %103, %cst_75 {dimension_numbers = #tpu.dot_dimension_numbers<[1], [0], [0], [1], [0, 0, 1, 1], [], []>} : vector<4x36xf32>, vector<36x256xf32>, vector<4x256xf32> -> vector<4x256xf32>
    %c0_76 = arith.constant 0 : index
    %c5_77 = arith.constant 5 : index
    %105 = vector.load %arg3[%c0_76, %c5_77] : memref<4x6xf32, #tpu.memory_space<vmem>>, vector<4x1xf32>
    %106 = vector.broadcast %105 : vector<4x1xf32> to vector<4x256xf32>
    %107 = arith.addf %104, %106 : vector<4x256xf32>
    %108 = arith.addf %107, %55 : vector<4x256xf32>
    %109 = arith.addf %108, %1 : vector<4x256xf32>
    %c0_78 = arith.constant 0 : index
    %c0_79 = arith.constant 0 : index
    %c0_80 = arith.constant 0 : index
    %110 = vector.load %arg5[%c0_78, %c0_79, %c0_80] : memref<1x4x256xf32, #tpu.memory_space<vmem>>, vector<1x4x256xf32>
    %111 = vector.shape_cast %110 : vector<1x4x256xf32> to vector<4x256xf32>
    %112 = vector.shape_cast %109 : vector<4x256xf32> to vector<1x4x256xf32>
    tpu.vector_store %arg5[%c0_78, %c0_79, %c0_80], %112 {strides = array<i32>} : memref<1x4x256xf32, #tpu.memory_space<vmem>>, vector<1x4x256xf32>,
    return
  }
  func.func @transform_0(%arg0: i32) -> (i32, i32, i32) {
    %c0_i32 = arith.constant 0 : i32
    %c0_i32_0 = arith.constant 0 : i32
    %c0_i32_1 = arith.constant 0 : i32
    return %arg0, %c0_i32, %c0_i32_0 : i32, i32, i32
  }
  func.func @transform_1(%arg0: i32) -> (i32, i32, i32) {
    %c0_i32 = arith.constant 0 : i32
    %c0_i32_0 = arith.constant 0 : i32
    %c0_i32_1 = arith.constant 0 : i32
    %c0_i32_2 = arith.constant 0 : i32
    return %c0_i32, %c0_i32_0, %c0_i32_1 : i32, i32, i32
  }
  func.func @transform_2(%arg0: i32) -> (i32, i32) {
    %c0_i32 = arith.constant 0 : i32
    %c0_i32_0 = arith.constant 0 : i32
    %c0_i32_1 = arith.constant 0 : i32
    return %c0_i32, %c0_i32_0 : i32, i32
  }
  func.func @transform_3(%arg0: i32) -> (i32, i32) {
    %c0_i32 = arith.constant 0 : i32
    %c0_i32_0 = arith.constant 0 : i32
    %c0_i32_1 = arith.constant 0 : i32
    return %c0_i32, %c0_i32_0 : i32, i32
  }
  func.func @transform_4(%arg0: i32) -> (i32, i32, i32) {
    %c0_i32 = arith.constant 0 : i32
    %c0_i32_0 = arith.constant 0 : i32
    %c0_i32_1 = arith.constant 0 : i32
    return %arg0, %c0_i32, %c0_i32_0 : i32, i32, i32
  }
}

</mosaic_0001>

<llo_original>
// kernel: tpu_custom_call.1
$region0: #{tpu_custom_call.1}
  #allocation0 [shape = 'u32[]', space=smem, size = 0x4, offset = 0x4, fixed_abs, tag = 'smem constant byte address 0x4 - core index']
  #allocation1 [shape = 'u32[144,128]{1,0:T(1,128)}', space=vmem, size = 0x12000, scoped, tag = 'internal scratch']
  %s0 = inlined_call_operand.hbm [shape: f32[2,4,256], index: 0, kind: input, shape index: {}]
  %s1 = inlined_call_operand.hbm [shape: f32[6,4,36], index: 1, kind: input, shape index: {}]
  %s2 = inlined_call_operand.vmem [shape: f32[4,6], index: 2, kind: input, shape index: {}]
  %s3 = inlined_call_operand.hbm [shape: f32[36,256], index: 3, kind: input, shape index: {}]
  %s4 = inlined_call_operand.hbm [shape: f32[2,4,256], index: 4, kind: output, shape index: {}]
  %s5 = sld [smem:[#allocation0]]
  $region61: #{tpu_custom_call.1} parent=0
    _
  %s7 = ssub.s32 1, %s5
  %s8 = scalar_select 0, %s7, %s5
  $region1: #{tpu_custom_call.1} parent=0
    #allocation2 [shape = 'u8[8192]{0}', space=vmem, size = 0x2000, scoped, tag = 'input window, operand 0']
    #allocation3 [shape = 's32[2]{0}', space=sflag, size = 0x8, scoped, tag = 'scoped memory for tpu_custom_call.1']
    #allocation4 [shape = 's32[2]{0}', space=sflag, size = 0x8, scoped, tag = 'scoped memory for tpu_custom_call.1']
    #allocation5 [shape = 'u8[12288]{0}', space=vmem, size = 0x3000, scoped, tag = 'input window, operand 1, single buffered']
    #allocation6 [shape = 's32[1]{0}', space=sflag, size = 0x4, scoped, tag = 'scoped memory for tpu_custom_call.1']
    #allocation7 [shape = 'u8[40960]{0}', space=vmem, size = 0xa000, scoped, tag = 'input window, operand 3, single buffered']
    #allocation8 [shape = 'u8[8192]{0}', space=vmem, size = 0x2000, scoped, tag = 'output window, operand 0']
    %9 = vsyncpa [#allocation3], 0
    %s10 = scalar_lea.sflag [#allocation3], 1
    %11 = vsyncpa %s10, 0
    %12 = vsyncpa [#allocation6], 0
    %13 = vsyncpa [#allocation4], 0
    %s14 = scalar_lea.sflag [#allocation4], 1
    %15 = vsyncpa %s14, 0
    loop: start=0, step=1, limit=4
    $region2: #{tpu_custom_call.1} parent=1 // loop_pre_header
      _
    $region3: #{tpu_custom_call.1} parent=1 // loop_header
      %s17 = sphi 0, %s21
      %p18 = scmp.ge.s32.totalorder %s17, 4
      %s27 = sphi 0, %s29
      %s30 = sphi 0, %s27
      %s31 = sphi 0, %s30
      %s47 = sphi 0, %s31
      %s51 = sphi 0, %s51
      %s53 = sphi 0, %s51
      %s54 = sphi 0, %s53
      %s68 = sphi 0, %s54
      %s72 = sphi 0, %s72
      %s74 = sphi 0, %s72
      %s75 = sphi 0, %s74
      %s89 = sphi 0, %s75
      %s93 = sphi 0, %s93
      %s95 = sphi 0, %s93
      %s96 = sphi 0, %s95
      %s110 = sphi 0, %s96
      %s116 = sphi 0, %s118
      %s119 = sphi 0, %s116
      %s120 = sphi 0, %s119
      %s136 = sphi 0, %s120
    $region4: #{tpu_custom_call.1} parent=1 // loop_header_branch
      %20 = sbr.rel (%p18) target = $region8
    $region5: #{tpu_custom_call.1} parent=1 // loop_body
      %s22 = ssub.s32 %s17, 1
      %s23 = ssub.s32 %s17, 2
      %s24 = sadd.s32 %s17, 1
      %s25 = ssub.s32 %s17, %s24
      %p26 = scmp.eq.s32.totalorder %s25, 0
      %s28 = sadd.s32 %s27, 1
      %s29 = scalar_select %p26, %s27, %s28
      %p32 = pneg %p26
      %p33 = scmp.eq.s32.totalorder %s17, 1
      %p34 = por %p32, %p33
      %p35 = scmp.ne.s32.totalorder %s27, %s30
      %p36 = scmp.eq.s32.totalorder %s17, 0
      %p37 = por %p35, %p36
      %p38 = scmp.ne.s32.totalorder %s27, %s30
      %p39 = scmp.eq.s32.totalorder %s22, 1
      %p40 = por %p38, %p39
      %p41 = scmp.ne.s32.totalorder %s30, %s31
      %p42 = scmp.eq.s32.totalorder %s22, 0
      %p43 = por %p41, %p42
      %p44 = scmp.ne.s32.totalorder %s30, %s31
      %p45 = scmp.eq.s32.totalorder %s23, 1
      %p46 = por %p44, %p45
      %p48 = scmp.ne.s32.totalorder %s31, %s47
      %p49 = scmp.eq.s32.totalorder %s23, 0
      %p50 = por %p48, %p49
      %s52 = sadd.s32 %s51, 1
      %p55 = scmp.eq.s32.totalorder %s17, 1
      %p56 = scmp.ne.s32.totalorder %s51, %s53
      %p57 = scmp.eq.s32.totalorder %s17, 0
      %p58 = por %p56, %p57
      %p59 = scmp.ne.s32.totalorder %s51, %s53
      %p60 = scmp.eq.s32.totalorder %s22, 1
      %p61 = por %p59, %p60
      %p62 = scmp.ne.s32.totalorder %s53, %s54
      %p63 = scmp.eq.s32.totalorder %s22, 0
      %p64 = por %p62, %p63
      %p65 = scmp.ne.s32.totalorder %s53, %s54
      %p66 = scmp.eq.s32.totalorder %s23, 1
      %p67 = por %p65, %p66
      %p69 = scmp.ne.s32.totalorder %s54, %s68
      %p70 = scmp.eq.s32.totalorder %s23, 0
      %p71 = por %p69, %p70
      %s73 = sadd.s32 %s72, 1
      %p76 = scmp.eq.s32.totalorder %s17, 1
      %p77 = scmp.ne.s32.totalorder %s72, %s74
      %p78 = scmp.eq.s32.totalorder %s17, 0
      %p79 = por %p77, %p78
      %p80 = scmp.ne.s32.totalorder %s72, %s74
      %p81 = scmp.eq.s32.totalorder %s22, 1
      %p82 = por %p80, %p81
      %p83 = scmp.ne.s32.totalorder %s74, %s75
      %p84 = scmp.eq.s32.totalorder %s22, 0
      %p85 = por %p83, %p84
      %p86 = scmp.ne.s32.totalorder %s74, %s75
      %p87 = scmp.eq.s32.totalorder %s23, 1
      %p88 = por %p86, %p87
      %p90 = scmp.ne.s32.totalorder %s75, %s89
      %p91 = scmp.eq.s32.totalorder %s23, 0
      %p92 = por %p90, %p91
      %s94 = sadd.s32 %s93, 1
      %p97 = scmp.eq.s32.totalorder %s17, 1
      %p98 = scmp.ne.s32.totalorder %s93, %s95
      %p99 = scmp.eq.s32.totalorder %s17, 0
      %p100 = por %p98, %p99
      %p101 = scmp.ne.s32.totalorder %s93, %s95
      %p102 = scmp.eq.s32.totalorder %s22, 1
      %p103 = por %p101, %p102
      %p104 = scmp.ne.s32.totalorder %s95, %s96
      %p105 = scmp.eq.s32.totalorder %s22, 0
      %p106 = por %p104, %p105
      %p107 = scmp.ne.s32.totalorder %s95, %s96
      %p108 = scmp.eq.s32.totalorder %s23, 1
      %p109 = por %p107, %p108
      %p111 = scmp.ne.s32.totalorder %s96, %s110
      %p112 = scmp.eq.s32.totalorder %s23, 0
      %p113 = por %p111, %p112
      %s114 = ssub.s32 %s17, %s24
      %p115 = scmp.eq.s32.totalorder %s114, 0
      %s117 = sadd.s32 %s116, 1
      %s118 = scalar_select %p115, %s116, %s117
      %p121 = pneg %p115
      %p122 = scmp.eq.s32.totalorder %s17, 1
      %p123 = por %p121, %p122
      %p124 = scmp.ne.s32.totalorder %s116, %s119
      %p125 = scmp.eq.s32.totalorder %s17, 0
      %p126 = por %p124, %p125
      %p127 = scmp.ne.s32.totalorder %s116, %s119
      %p128 = scmp.eq.s32.totalorder %s22, 1
      %p129 = por %p127, %p128
      %p130 = scmp.ne.s32.totalorder %s119, %s120
      %p131 = scmp.eq.s32.totalorder %s22, 0
      %p132 = por %p130, %p131
      %p133 = scmp.ne.s32.totalorder %s119, %s120
      %p134 = scmp.eq.s32.totalorder %s23, 1
      %p135 = por %p133, %p134
      %p137 = scmp.ne.s32.totalorder %s120, %s136
      %p138 = scmp.eq.s32.totalorder %s23, 0
      %p139 = por %p137, %p138
      %p140 = scmp.le.s32.totalorder 1, %s17
      %p141 = scmp.lt.s32.totalorder %s17, 3
      %p142 = pnand %p140, %p141
      %p143 = pneg %p142
      // Predicated region
      $region9: #{tpu_custom_call.1} parent=5 // pred_check
        _
      $region10: #{tpu_custom_call.1} parent=5 // pred_check_branch
        %145 = sbr.rel (%p142) target = $region12
      $region11: #{tpu_custom_call.1} parent=5 // pred_region
        %s146 = ssub.s32 %s17, 1
        // Predicated region
        $region13: #{tpu_custom_call.1} parent=11 // pred_check
          %p147 = pneg %p64
        $region14: #{tpu_custom_call.1} parent=11 // pred_check_branch
          %149 = sbr.rel (%p147) target = $region16
        $region15: #{tpu_custom_call.1} parent=11 // pred_region
          %s151 = ssub.s32 384, 384
          %152 = vsyncadd [#allocation6], %s151
          %s153 = sshll.u32 [#allocation5], 4
          %s154 = int_to_ptr.vmem [resolvable:$true] %s153
          %159 = dma.hbm_to_vmem [thread:$0]  %s1, 384, %s154, [#allocation6], 64, 64, 4
        $region16: #{tpu_custom_call.1} parent=11 // pred_fallthru
          _
        // Predicated region
        $region17: #{tpu_custom_call.1} parent=11 // pred_check
          %p160 = pneg %p85
        $region18: #{tpu_custom_call.1} parent=11 // pred_check_branch
          %162 = sbr.rel (%p160) target = $region20
        $region19: #{tpu_custom_call.1} parent=11 // pred_region
          _
        $region20: #{tpu_custom_call.1} parent=11 // pred_fallthru
          _
        // Predicated region
        $region21: #{tpu_custom_call.1} parent=11 // pred_check
          %p163 = pneg %p106
        $region22: #{tpu_custom_call.1} parent=11 // pred_check_branch
          %165 = sbr.rel (%p163) target = $region24
        $region23: #{tpu_custom_call.1} parent=11 // pred_region
          %s167 = ssub.s32 1280, 1280
          %168 = vsyncadd [#allocation6], %s167
          %s169 = sshll.u32 [#allocation7], 4
          %s170 = int_to_ptr.vmem [resolvable:$true] %s169
          %175 = dma.hbm_to_vmem [thread:$0]  %s3, 1280, %s170, [#allocation6], 256, 256, 16
        $region24: #{tpu_custom_call.1} parent=11 // pred_fallthru
          _
      $region12: #{tpu_custom_call.1} parent=5 // pred_fallthru
        _
      %p176 = scmp.lt.s32.totalorder %s17, 2
      // Predicated region
      $region25: #{tpu_custom_call.1} parent=5 // pred_check
        %p177 = pneg %p176
      $region26: #{tpu_custom_call.1} parent=5 // pred_check_branch
        %179 = sbr.rel (%p177) target = $region28
      $region27: #{tpu_custom_call.1} parent=5 // pred_region
        // Predicated region
        $region29: #{tpu_custom_call.1} parent=27 // pred_check
          %p180 = pneg %p37
        $region30: #{tpu_custom_call.1} parent=27 // pred_check_branch
          %182 = sbr.rel (%p180) target = $region32
        $region31: #{tpu_custom_call.1} parent=27 // pred_region
          %s183 = sand.u32 %s27, 1
          %s184 = scalar_lea.sflag [#allocation3], %s183
          %s185 = sand.u32 %s27, 1
          %s186 = smul.addr %s185, 8
          %s187 = scalar_lea.vmem [#allocation2], %s186
          %s189 = ssub.s32 128, 128
          %190 = vsyncadd %s184, %s189
          %s191 = smul.addr %s17, 2
          %s192 = smul.addr %s191, 64
          %s193 = scalar_lea.hbm %s0, %s192
          %s195 = sshll.u32 %s187, 4
          %s196 = int_to_ptr.vmem [resolvable:$true] %s195
          %198 = dma.hbm_to_vmem [thread:$0]  %s193, 128, %s196, %s184
        $region32: #{tpu_custom_call.1} parent=27 // pred_fallthru
          _
      $region28: #{tpu_custom_call.1} parent=5 // pred_fallthru
        _
      %p199 = scmp.le.s32.totalorder 1, %s17
      %p200 = scmp.lt.s32.totalorder %s17, 3
      %p201 = pnand %p199, %p200
      %p202 = pneg %p201
      // Predicated region
      $region33: #{tpu_custom_call.1} parent=5 // pred_check
        _
      $region34: #{tpu_custom_call.1} parent=5 // pred_check_branch
        %204 = sbr.rel (%p201) target = $region36
      $region35: #{tpu_custom_call.1} parent=5 // pred_region
        %s205 = ssub.s32 %s17, 1
        %s206 = sand.u32 %s30, 1
        %s207 = scalar_lea.sflag [#allocation3], %s206
        %s208 = sand.u32 %s30, 1
        %s209 = smul.addr %s208, 8
        %s210 = scalar_lea.vmem [#allocation2], %s209
        // Predicated region
        $region37: #{tpu_custom_call.1} parent=35 // pred_check
          %p211 = pneg %p43
        $region38: #{tpu_custom_call.1} parent=35 // pred_check_branch
          %213 = sbr.rel (%p211) target = $region40
        $region39: #{tpu_custom_call.1} parent=35 // pred_region
          %214 = dma.done %s207, 128
        $region40: #{tpu_custom_call.1} parent=35 // pred_fallthru
          _
        // Predicated region
        $region41: #{tpu_custom_call.1} parent=35 // pred_check
          %p215 = pneg %p64
        $region42: #{tpu_custom_call.1} parent=35 // pred_check_branch
          %217 = sbr.rel (%p215) target = $region44
        $region43: #{tpu_custom_call.1} parent=35 // pred_region
          %218 = dma.done [#allocation6], 384
        $region44: #{tpu_custom_call.1} parent=35 // pred_fallthru
          _
        // Predicated region
        $region45: #{tpu_custom_call.1} parent=35 // pred_check
          %p219 = pneg %p106
        $region46: #{tpu_custom_call.1} parent=35 // pred_check_branch
          %221 = sbr.rel (%p219) target = $region48
        $region47: #{tpu_custom_call.1} parent=35 // pred_region
          %222 = dma.done [#allocation6], 1280
        $region48: #{tpu_custom_call.1} parent=35 // pred_fallthru
          _
        %s223 = sand.u32 %s30, 1
        %s224 = scalar_lea.sflag [#allocation3], %s223
        %s225 = sand.u32 %s30, 1
        %s226 = smul.addr %s225, 8
        %s227 = scalar_lea.vmem [#allocation2], %s226
        %p228 = pneg %p43
        %p229 = pneg %p40
        %p230 = pneg %p64
        %p231 = pneg %p61
        %p232 = pneg %p85
        %p233 = pneg %p82
        %p234 = pneg %p106
        %p235 = pneg %p103
        %p236 = pneg %p132
        %p237 = pneg %p129
        %s238 = sand.u32 %s119, 1
        %s239 = scalar_lea.sflag [#allocation4], %s238
        %s240 = sand.u32 %s119, 1
        %s241 = smul.addr %s240, 8
        %s242 = scalar_lea.vmem [#allocation8], %s241
        %v243 = vld [vmem:[%s210] sm:$0xff]
        %v244 = vld [vmem:[#allocation7] sm:$0xff]
        %v245 = vld [vmem:[#allocation7 + $0x8] sm:$0xff]
        %v246 = vld [vmem:[#allocation7 + $0x10] sm:$0xff]
        %v247 = vld [vmem:[#allocation7 + $0x18] sm:$0xff]
        %v248 = vld [vmem:[#allocation7 + $0x20] sm:$0xff]
        %v249 = vld [vmem:[#allocation7 + $0x28] sm:$0xff]
        %v250 = vld [vmem:[#allocation7 + $0x30] sm:$0xff]
        %v251 = vld [vmem:[#allocation7 + $0x38] sm:$0xff]
        %v252 = vld [vmem:[#allocation7 + $0x40] sm:$0xf]
        %v253 = vld [vmem:[#allocation7 + $0x48] sm:$0xf]
        %v254 = vld [vmem:[#allocation5] sm:$0xf]
        %v256 = vcombine.high %v243, %v243
        %258 = vrot.lane.b32.xlu0 %v243, 17
        %v259 = vpop.permute.xlu0 %258
        %260 = vrot.lane.b32.xlu0 %v256, 17
        %v261 = vpop.permute.xlu0 %260
        %v262 = vlaneseq
        %v263 = vand.u32 %v262, 127
        %vm264 = vcmp.lt.s32.totalorder %v263, 17
        %v265 = vsel %vm264, %v259, %v261
        %v266 = vsel %vm264, %v261, %v259
        %267 = vrot.lane.b32.xlu0 %v243, 16
        %v268 = vpop.permute.xlu0 %267
        %269 = vrot.lane.b32.xlu0 %v256, 16
        %v270 = vpop.permute.xlu0 %269
        %vm271 = vcmp.lt.s32.totalorder %v263, 16
        %v272 = vsel %vm271, %v268, %v270
        %v273 = vsel %vm271, %v270, %v268
        %274 = vrot.lane.b32.xlu0 %v243, 15
        %v275 = vpop.permute.xlu0 %274
        %276 = vrot.lane.b32.xlu0 %v256, 15
        %v277 = vpop.permute.xlu0 %276
        %vm278 = vcmp.lt.s32.totalorder %v263, 15
        %v279 = vsel %vm278, %v275, %v277
        %v280 = vsel %vm278, %v277, %v275
        %281 = vrot.lane.b32.xlu0 %v243, 1
        %v282 = vpop.permute.xlu0 %281
        %283 = vrot.lane.b32.xlu0 %v256, 1
        %v284 = vpop.permute.xlu0 %283
        %vm285 = vcmp.lt.s32.totalorder %v263, 1
        %v286 = vsel %vm285, %v282, %v284
        %v287 = vsel %vm285, %v284, %v282
        %288 = vrot.lane.b32.xlu0 %v243, 127
        %v289 = vpop.permute.xlu0 %288
        %290 = vrot.lane.b32.xlu0 %v256, 127
        %v291 = vpop.permute.xlu0 %290
        %vm292 = vcmp.lt.s32.totalorder %v263, 127
        %v293 = vsel %vm292, %v289, %v291
        %v294 = vsel %vm292, %v291, %v289
        %295 = vrot.lane.b32.xlu0 %v243, 113
        %v296 = vpop.permute.xlu0 %295
        %297 = vrot.lane.b32.xlu0 %v256, 113
        %v298 = vpop.permute.xlu0 %297
        %vm299 = vcmp.lt.s32.totalorder %v263, 113
        %v300 = vsel %vm299, %v296, %v298
        %v301 = vsel %vm299, %v298, %v296
        %302 = vrot.lane.b32.xlu0 %v243, 112
        %v303 = vpop.permute.xlu0 %302
        %304 = vrot.lane.b32.xlu0 %v256, 112
        %v305 = vpop.permute.xlu0 %304
        %vm306 = vcmp.lt.s32.totalorder %v263, 112
        %v307 = vsel %vm306, %v303, %v305
        %v308 = vsel %vm306, %v305, %v303
        %309 = vrot.lane.b32.xlu0 %v243, 111
        %v310 = vpop.permute.xlu0 %309
        %311 = vrot.lane.b32.xlu0 %v256, 111
        %v312 = vpop.permute.xlu0 %311
        %vm313 = vcmp.lt.s32.totalorder %v263, 111
        %v314 = vsel %vm313, %v310, %v312
        %v315 = vsel %vm313, %v312, %v310
        %v318 = vrot.slane %v273, 4
        %v319 = vrot.slane %v272, 4
        %v324 = vrot.slane %v287, 4
        %v325 = vrot.slane %v286, 4
        %v330 = vrot.slane %v293, 4
        %v331 = vrot.slane %v294, 4
        %v336 = vrot.slane %v307, 4
        %v337 = vrot.slane %v308, 4
        %vm340 = vcmask 1043456
        %v341 = vsel %vm340, %v266, %v318
        %v342 = vsel %vm340, %v265, %v319
        %v343 = vsel %vm340, %v280, %v324
        %v344 = vsel %vm340, %v279, %v325
        %v345 = vsel %vm340, %v243, %v330
        %v346 = vsel %vm340, %v256, %v331
        %v347 = vsel %vm340, %v300, %v336
        %v348 = vsel %vm340, %v301, %v337
        %v349 = vmul.f32 %v341, %v244
        %v350 = vmul.f32 %v342, %v245
        %v351 = vmul.f32 %v343, %v246
        %v352 = vmul.f32 %v344, %v247
        %v353 = vmul.f32 %v345, %v248
        %v354 = vmul.f32 %v346, %v249
        %v355 = vmul.f32 %v347, %v250
        %v356 = vmul.f32 %v348, %v251
        %v357 = vmul.f32 %v314, %v252
        %v358 = vmul.f32 %v315, %v253
        %v359 = vld [vmem:[%s2] sm:$0xf]
        %361 = vset.pattern.permute.xlu0 0
        %362 = vperm.xlu0 %361, %v359
        %v363 = vpop.permute.xlu0 %362
        %vm365 = vcmask 293888
        %v367 = vsel %vm365, %v254, 0
        %v370 = vsel %vm340, %v357, 0
        %v373 = vsel %vm340, %v358, 0
        %375 = vmatprep.subr.mxu0 %v350
        %376 = vmatpush1.msra.mxu0 %v349
        %377 = vmatprep.subr.mxu0 %v352
        %378 = vmatpush1.msra.mxu0 %v351
        %379 = vmatprep.subr.mxu0 %v354
        %380 = vmatpush1.msra.mxu0 %v353
        %381 = vmatprep.subr.mxu0 %v356
        %382 = vmatpush1.msra.mxu0 %v355
        %383 = vmatprep.subr.mxu0 %v373
        %384 = vmatpush1.msra.mxu0 %v370
        %385 = vmatprep.subr.mxu0 0.0
        %386 = vmatpush1.msra.mxu0 0.0
        %387 = vmatprep.subr.mxu0 0.0
        %388 = vmatpush1.msra.mxu0 0.0
        %389 = vmatprep.subr.mxu0 0.0
        %390 = vmatpush1.msra.mxu0 0.0
        %391 = vmatprep.subr.mxu0 0.0
        %392 = vmatpush1.msra.mxu0 0.0
        %393 = vmatprep.subr.mxu0 0.0
        %394 = vmatpush1.msra.mxu0 0.0
        %395 = vmatprep.subr.mxu0 0.0
        %396 = vmatpush1.msra.mxu0 0.0
        %397 = vmatprep.subr.mxu0 0.0
        %398 = vmatpush1.msra.mxu0 0.0
        %399 = vmatprep.subr.mxu0 0.0
        %400 = vmatpush1.msra.mxu0 0.0
        %401 = vmatprep.subr.mxu0 0.0
        %402 = vmatpush1.msra.mxu0 0.0
        %403 = vmatprep.subr.mxu0 0.0
        %404 = vmatpush1.msra.mxu0 0.0
        %405 = vmatprep.subr.mxu0 0.0
        %406 = vmatpush1.msra.mxu0 0.0
        %407 = vmatprep.subr.mxu0 0.0
        %408 = vmatpush1.msra.mxu0 0.0
        %409 = vmatprep.subr.mxu0 0.0
        %410 = vmatpush1.msra.mxu0 0.0
        %411 = vmatprep.subr.mxu0 0.0
        %412 = vmatpush1.msra.mxu0 0.0
        %413 = vmatprep.subr.mxu0 0.0
        %414 = vmatpush1.msra.mxu0 0.0
        %415 = vmatprep.subr.mxu0 0.0
        %416 = vmatpush1.msra.mxu0 0.0
        %417 = vmatprep.subr.mxu0 0.0
        %418 = vmatpush1.msra.mxu0 0.0
        %419 = vmatprep.subr.mxu0 0.0
        %420 = vmatpush1.msra.mxu0 0.0
        %421 = vmatprep.subr.mxu0 0.0
        %422 = vmatpush1.msra.mxu0 0.0
        %423 = vmatprep.subr.mxu0 0.0
        %424 = vmatpush1.msra.mxu0 0.0
        %425 = vmatprep.subr.mxu0 0.0
        %426 = vmatpush1.msra.mxu0 0.0
        %427 = vmatprep.subr.mxu0 0.0
        %428 = vmatpush1.msra.mxu0 0.0
        %429 = vmatprep.subr.mxu0 0.0
        %430 = vmatpush1.msra.mxu0 0.0
        %431 = vmatprep.subr.mxu0 0.0
        %432 = vmatpush1.msra.mxu0 0.0
        %433 = vmatprep.subr.mxu0 0.0
        %434 = vmatpush1.msra.mxu0 0.0
        %435 = vmatprep.subr.mxu0 0.0
        %436 = vmatpush1.msra.mxu0 0.0
        %437 = vmatprep.subr.mxu0 0.0
        %438 = vmatpush1.msra.mxu0 0.0
        %439 = vmatprep.mubr.f32.mxu0 0.0
        %440 = vmatmul.mubr.f32.gmra.mrb[0].mxu0 %v367
        %v441 = vpop.f32.mrb[0].mxu0
        %v442 = vadd.f32 %v363, %v441
        %v443 = vpop.f32.mrb[0].mxu0
        %v444 = vadd.f32 %v363, %v443
        %445 = vdwg.mxu0
        %v446 = vmax.f32 %v442, 0.0
        %v447 = vmax.f32 %v444, 0.0
        %s448 = scalar_lea.vmem [#allocation5], 4
        %v449 = vld [vmem:[%s448] sm:$0xf]
        %450 = vrot.lane.b32.xlu0 %v446, 17
        %v451 = vpop.permute.xlu0 %450
        %452 = vrot.lane.b32.xlu0 %v447, 17
        %v453 = vpop.permute.xlu0 %452
        %v454 = vsel %vm264, %v451, %v453
        %v455 = vsel %vm264, %v453, %v451
        %456 = vrot.lane.b32.xlu0 %v446, 16
        %v457 = vpop.permute.xlu0 %456
        %458 = vrot.lane.b32.xlu0 %v447, 16
        %v459 = vpop.permute.xlu0 %458
        %v460 = vsel %vm271, %v457, %v459
        %v461 = vsel %vm271, %v459, %v457
        %462 = vrot.lane.b32.xlu0 %v446, 15
        %v463 = vpop.permute.xlu0 %462
        %464 = vrot.lane.b32.xlu0 %v447, 15
        %v465 = vpop.permute.xlu0 %464
        %v466 = vsel %vm278, %v463, %v465
        %v467 = vsel %vm278, %v465, %v463
        %468 = vrot.lane.b32.xlu0 %v446, 1
        %v469 = vpop.permute.xlu0 %468
        %470 = vrot.lane.b32.xlu0 %v447, 1
        %v471 = vpop.permute.xlu0 %470
        %v472 = vsel %vm285, %v469, %v471
        %v473 = vsel %vm285, %v471, %v469
        %474 = vrot.lane.b32.xlu0 %v446, 127
        %v475 = vpop.permute.xlu0 %474
        %476 = vrot.lane.b32.xlu0 %v447, 127
        %v477 = vpop.permute.xlu0 %476
        %v478 = vsel %vm292, %v475, %v477
        %v479 = vsel %vm292, %v477, %v475
        %480 = vrot.lane.b32.xlu0 %v446, 113
        %v481 = vpop.permute.xlu0 %480
        %482 = vrot.lane.b32.xlu0 %v447, 113
        %v483 = vpop.permute.xlu0 %482
        %v484 = vsel %vm299, %v481, %v483
        %v485 = vsel %vm299, %v483, %v481
        %486 = vrot.lane.b32.xlu0 %v446, 112
        %v487 = vpop.permute.xlu0 %486
        %488 = vrot.lane.b32.xlu0 %v447, 112
        %v489 = vpop.permute.xlu0 %488
        %v490 = vsel %vm306, %v487, %v489
        %v491 = vsel %vm306, %v489, %v487
        %492 = vrot.lane.b32.xlu0 %v446, 111
        %v493 = vpop.permute.xlu0 %492
        %494 = vrot.lane.b32.xlu0 %v447, 111
        %v495 = vpop.permute.xlu0 %494
        %v496 = vsel %vm313, %v493, %v495
        %v497 = vsel %vm313, %v495, %v493
        %v500 = vrot.slane %v461, 4
        %v501 = vrot.slane %v460, 4
        %v506 = vrot.slane %v473, 4
        %v507 = vrot.slane %v472, 4
        %v512 = vrot.slane %v478, 4
        %v513 = vrot.slane %v479, 4
        %v518 = vrot.slane %v490, 4
        %v519 = vrot.slane %v491, 4
        %v522 = vsel %vm340, %v455, %v500
        %v523 = vsel %vm340, %v454, %v501
        %v524 = vsel %vm340, %v467, %v506
        %v525 = vsel %vm340, %v466, %v507
        %v526 = vsel %vm340, %v446, %v512
        %v527 = vsel %vm340, %v447, %v513
        %v528 = vsel %vm340, %v484, %v518
        %v529 = vsel %vm340, %v485, %v519
        %v530 = vmul.f32 %v522, %v244
        %v531 = vmul.f32 %v523, %v245
        %v532 = vmul.f32 %v524, %v246
        %v533 = vmul.f32 %v525, %v247
        %v534 = vmul.f32 %v526, %v248
        %v535 = vmul.f32 %v527, %v249
        %v536 = vmul.f32 %v528, %v250
        %v537 = vmul.f32 %v529, %v251
        %v538 = vmul.f32 %v496, %v252
        %v539 = vmul.f32 %v497, %v253
        %540 = vset.pattern.permute.xlu0 1
        %541 = vperm.xlu0 %540, %v359
        %v542 = vpop.permute.xlu0 %541
        %v545 = vsel %vm365, %v449, 0
        %v548 = vsel %vm340, %v538, 0
        %v551 = vsel %vm340, %v539, 0
        %553 = vmatprep.subr.mxu0 %v531
        %554 = vmatpush1.msra.mxu0 %v530
        %555 = vmatprep.subr.mxu0 %v533
        %556 = vmatpush1.msra.mxu0 %v532
        %557 = vmatprep.subr.mxu0 %v535
        %558 = vmatpush1.msra.mxu0 %v534
        %559 = vmatprep.subr.mxu0 %v537
        %560 = vmatpush1.msra.mxu0 %v536
        %561 = vmatprep.subr.mxu0 %v551
        %562 = vmatpush1.msra.mxu0 %v548
        %563 = vmatprep.subr.mxu0 0.0
        %564 = vmatpush1.msra.mxu0 0.0
        %565 = vmatprep.subr.mxu0 0.0
        %566 = vmatpush1.msra.mxu0 0.0
        %567 = vmatprep.subr.mxu0 0.0
        %568 = vmatpush1.msra.mxu0 0.0
        %569 = vmatprep.subr.mxu0 0.0
        %570 = vmatpush1.msra.mxu0 0.0
        %571 = vmatprep.subr.mxu0 0.0
        %572 = vmatpush1.msra.mxu0 0.0
        %573 = vmatprep.subr.mxu0 0.0
        %574 = vmatpush1.msra.mxu0 0.0
        %575 = vmatprep.subr.mxu0 0.0
        %576 = vmatpush1.msra.mxu0 0.0
        %577 = vmatprep.subr.mxu0 0.0
        %578 = vmatpush1.msra.mxu0 0.0
        %579 = vmatprep.subr.mxu0 0.0
        %580 = vmatpush1.msra.mxu0 0.0
        %581 = vmatprep.subr.mxu0 0.0
        %582 = vmatpush1.msra.mxu0 0.0
        %583 = vmatprep.subr.mxu0 0.0
        %584 = vmatpush1.msra.mxu0 0.0
        %585 = vmatprep.subr.mxu0 0.0
        %586 = vmatpush1.msra.mxu0 0.0
        %587 = vmatprep.subr.mxu0 0.0
        %588 = vmatpush1.msra.mxu0 0.0
        %589 = vmatprep.subr.mxu0 0.0
        %590 = vmatpush1.msra.mxu0 0.0
        %591 = vmatprep.subr.mxu0 0.0
        %592 = vmatpush1.msra.mxu0 0.0
        %593 = vmatprep.subr.mxu0 0.0
        %594 = vmatpush1.msra.mxu0 0.0
        %595 = vmatprep.subr.mxu0 0.0
        %596 = vmatpush1.msra.mxu0 0.0
        %597 = vmatprep.subr.mxu0 0.0
        %598 = vmatpush1.msra.mxu0 0.0
        %599 = vmatprep.subr.mxu0 0.0
        %600 = vmatpush1.msra.mxu0 0.0
        %601 = vmatprep.subr.mxu0 0.0
        %602 = vmatpush1.msra.mxu0 0.0
        %603 = vmatprep.subr.mxu0 0.0
        %604 = vmatpush1.msra.mxu0 0.0
        %605 = vmatprep.subr.mxu0 0.0
        %606 = vmatpush1.msra.mxu0 0.0
        %607 = vmatprep.subr.mxu0 0.0
        %608 = vmatpush1.msra.mxu0 0.0
        %609 = vmatprep.subr.mxu0 0.0
        %610 = vmatpush1.msra.mxu0 0.0
        %611 = vmatprep.subr.mxu0 0.0
        %612 = vmatpush1.msra.mxu0 0.0
        %613 = vmatprep.subr.mxu0 0.0
        %614 = vmatpush1.msra.mxu0 0.0
        %615 = vmatprep.subr.mxu0 0.0
        %616 = vmatpush1.msra.mxu0 0.0
        %617 = vmatprep.mubr.f32.mxu0 0.0
        %618 = vmatmul.mubr.f32.gmra.mrb[0].mxu0 %v545
        %v619 = vpop.f32.mrb[0].mxu0
        %v620 = vadd.f32 %v542, %v619
        %v621 = vpop.f32.mrb[0].mxu0
        %v622 = vadd.f32 %v542, %v621
        %623 = vdwg.mxu0
        %v624 = vmax.f32 %v620, 0.0
        %v625 = vmax.f32 %v622, 0.0
        %s626 = scalar_lea.vmem [#allocation5], 8
        %v627 = vld [vmem:[%s626] sm:$0xf]
        %628 = vrot.lane.b32.xlu0 %v624, 17
        %v629 = vpop.permute.xlu0 %628
        %630 = vrot.lane.b32.xlu0 %v625, 17
        %v631 = vpop.permute.xlu0 %630
        %v632 = vsel %vm264, %v629, %v631
        %v633 = vsel %vm264, %v631, %v629
        %634 = vrot.lane.b32.xlu0 %v624, 16
        %v635 = vpop.permute.xlu0 %634
        %636 = vrot.lane.b32.xlu0 %v625, 16
        %v637 = vpop.permute.xlu0 %636
        %v638 = vsel %vm271, %v635, %v637
        %v639 = vsel %vm271, %v637, %v635
        %640 = vrot.lane.b32.xlu0 %v624, 15
        %v641 = vpop.permute.xlu0 %640
        %642 = vrot.lane.b32.xlu0 %v625, 15
        %v643 = vpop.permute.xlu0 %642
        %v644 = vsel %vm278, %v641, %v643
        %v645 = vsel %vm278, %v643, %v641
        %646 = vrot.lane.b32.xlu0 %v624, 1
        %v647 = vpop.permute.xlu0 %646
        %648 = vrot.lane.b32.xlu0 %v625, 1
        %v649 = vpop.permute.xlu0 %648
        %v650 = vsel %vm285, %v647, %v649
        %v651 = vsel %vm285, %v649, %v647
        %652 = vrot.lane.b32.xlu0 %v624, 127
        %v653 = vpop.permute.xlu0 %652
        %654 = vrot.lane.b32.xlu0 %v625, 127
        %v655 = vpop.permute.xlu0 %654
        %v656 = vsel %vm292, %v653, %v655
        %v657 = vsel %vm292, %v655, %v653
        %658 = vrot.lane.b32.xlu0 %v624, 113
        %v659 = vpop.permute.xlu0 %658
        %660 = vrot.lane.b32.xlu0 %v625, 113
        %v661 = vpop.permute.xlu0 %660
        %v662 = vsel %vm299, %v659, %v661
        %v663 = vsel %vm299, %v661, %v659
        %664 = vrot.lane.b32.xlu0 %v624, 112
        %v665 = vpop.permute.xlu0 %664
        %666 = vrot.lane.b32.xlu0 %v625, 112
        %v667 = vpop.permute.xlu0 %666
        %v668 = vsel %vm306, %v665, %v667
        %v669 = vsel %vm306, %v667, %v665
        %670 = vrot.lane.b32.xlu0 %v624, 111
        %v671 = vpop.permute.xlu0 %670
        %672 = vrot.lane.b32.xlu0 %v625, 111
        %v673 = vpop.permute.xlu0 %672
        %v674 = vsel %vm313, %v671, %v673
        %v675 = vsel %vm313, %v673, %v671
        %v678 = vrot.slane %v639, 4
        %v679 = vrot.slane %v638, 4
        %v684 = vrot.slane %v651, 4
        %v685 = vrot.slane %v650, 4
        %v690 = vrot.slane %v656, 4
        %v691 = vrot.slane %v657, 4
        %v696 = vrot.slane %v668, 4
        %v697 = vrot.slane %v669, 4
        %v700 = vsel %vm340, %v633, %v678
        %v701 = vsel %vm340, %v632, %v679
        %v702 = vsel %vm340, %v645, %v684
        %v703 = vsel %vm340, %v644, %v685
        %v704 = vsel %vm340, %v624, %v690
        %v705 = vsel %vm340, %v625, %v691
        %v706 = vsel %vm340, %v662, %v696
        %v707 = vsel %vm340, %v663, %v697
        %v708 = vmul.f32 %v700, %v244
        %v709 = vmul.f32 %v701, %v245
        %v710 = vmul.f32 %v702, %v246
        %v711 = vmul.f32 %v703, %v247
        %v712 = vmul.f32 %v704, %v248
        %v713 = vmul.f32 %v705, %v249
        %v714 = vmul.f32 %v706, %v250
        %v715 = vmul.f32 %v707, %v251
        %v716 = vmul.f32 %v674, %v252
        %v717 = vmul.f32 %v675, %v253
        %718 = vset.pattern.permute.xlu0 2
        %719 = vperm.xlu0 %718, %v359
        %v720 = vpop.permute.xlu0 %719
        %v723 = vsel %vm365, %v627, 0
        %v726 = vsel %vm340, %v716, 0
        %v729 = vsel %vm340, %v717, 0
        %731 = vmatprep.subr.mxu0 %v709
        %732 = vmatpush1.msra.mxu0 %v708
        %733 = vmatprep.subr.mxu0 %v711
        %734 = vmatpush1.msra.mxu0 %v710
        %735 = vmatprep.subr.mxu0 %v713
        %736 = vmatpush1.msra.mxu0 %v712
        %737 = vmatprep.subr.mxu0 %v715
        %738 = vmatpush1.msra.mxu0 %v714
        %739 = vmatprep.subr.mxu0 %v729
        %740 = vmatpush1.msra.mxu0 %v726
        %741 = vmatprep.subr.mxu0 0.0
        %742 = vmatpush1.msra.mxu0 0.0
        %743 = vmatprep.subr.mxu0 0.0
        %744 = vmatpush1.msra.mxu0 0.0
        %745 = vmatprep.subr.mxu0 0.0
        %746 = vmatpush1.msra.mxu0 0.0
        %747 = vmatprep.subr.mxu0 0.0
        %748 = vmatpush1.msra.mxu0 0.0
        %749 = vmatprep.subr.mxu0 0.0
        %750 = vmatpush1.msra.mxu0 0.0
        %751 = vmatprep.subr.mxu0 0.0
        %752 = vmatpush1.msra.mxu0 0.0
        %753 = vmatprep.subr.mxu0 0.0
        %754 = vmatpush1.msra.mxu0 0.0
        %755 = vmatprep.subr.mxu0 0.0
        %756 = vmatpush1.msra.mxu0 0.0
        %757 = vmatprep.subr.mxu0 0.0
        %758 = vmatpush1.msra.mxu0 0.0
        %759 = vmatprep.subr.mxu0 0.0
        %760 = vmatpush1.msra.mxu0 0.0
        %761 = vmatprep.subr.mxu0 0.0
        %762 = vmatpush1.msra.mxu0 0.0
        %763 = vmatprep.subr.mxu0 0.0
        %764 = vmatpush1.msra.mxu0 0.0
        %765 = vmatprep.subr.mxu0 0.0
        %766 = vmatpush1.msra.mxu0 0.0
        %767 = vmatprep.subr.mxu0 0.0
        %768 = vmatpush1.msra.mxu0 0.0
        %769 = vmatprep.subr.mxu0 0.0
        %770 = vmatpush1.msra.mxu0 0.0
        %771 = vmatprep.subr.mxu0 0.0
        %772 = vmatpush1.msra.mxu0 0.0
        %773 = vmatprep.subr.mxu0 0.0
        %774 = vmatpush1.msra.mxu0 0.0
        %775 = vmatprep.subr.mxu0 0.0
        %776 = vmatpush1.msra.mxu0 0.0
        %777 = vmatprep.subr.mxu0 0.0
        %778 = vmatpush1.msra.mxu0 0.0
        %779 = vmatprep.subr.mxu0 0.0
        %780 = vmatpush1.msra.mxu0 0.0
        %781 = vmatprep.subr.mxu0 0.0
        %782 = vmatpush1.msra.mxu0 0.0
        %783 = vmatprep.subr.mxu0 0.0
        %784 = vmatpush1.msra.mxu0 0.0
        %785 = vmatprep.subr.mxu0 0.0
        %786 = vmatpush1.msra.mxu0 0.0
        %787 = vmatprep.subr.mxu0 0.0
        %788 = vmatpush1.msra.mxu0 0.0
        %789 = vmatprep.subr.mxu0 0.0
        %790 = vmatpush1.msra.mxu0 0.0
        %791 = vmatprep.subr.mxu0 0.0
        %792 = vmatpush1.msra.mxu0 0.0
        %793 = vmatprep.subr.mxu0 0.0
        %794 = vmatpush1.msra.mxu0 0.0
        %795 = vmatprep.mubr.f32.mxu0 0.0
        %796 = vmatmul.mubr.f32.gmra.mrb[0].mxu0 %v723
        %v797 = vpop.f32.mrb[0].mxu0
        %v798 = vadd.f32 %v720, %v797
        %v799 = vpop.f32.mrb[0].mxu0
        %v800 = vadd.f32 %v720, %v799
        %801 = vdwg.mxu0
        %v802 = vadd.f32 %v798, %v243
        %v803 = vadd.f32 %v800, %v256
        %s804 = scalar_lea.vmem [#allocation5], 12
        %v805 = vld [vmem:[%s804] sm:$0xf]
        %806 = vrot.lane.b32.xlu0 %v802, 17
        %v807 = vpop.permute.xlu0 %806
        %808 = vrot.lane.b32.xlu0 %v803, 17
        %v809 = vpop.permute.xlu0 %808
        %v810 = vsel %vm264, %v807, %v809
        %v811 = vsel %vm264, %v809, %v807
        %812 = vrot.lane.b32.xlu0 %v802, 16
        %v813 = vpop.permute.xlu0 %812
        %814 = vrot.lane.b32.xlu0 %v803, 16
        %v815 = vpop.permute.xlu0 %814
        %v816 = vsel %vm271, %v813, %v815
        %v817 = vsel %vm271, %v815, %v813
        %818 = vrot.lane.b32.xlu0 %v802, 15
        %v819 = vpop.permute.xlu0 %818
        %820 = vrot.lane.b32.xlu0 %v803, 15
        %v821 = vpop.permute.xlu0 %820
        %v822 = vsel %vm278, %v819, %v821
        %v823 = vsel %vm278, %v821, %v819
        %824 = vrot.lane.b32.xlu0 %v802, 1
        %v825 = vpop.permute.xlu0 %824
        %826 = vrot.lane.b32.xlu0 %v803, 1
        %v827 = vpop.permute.xlu0 %826
        %v828 = vsel %vm285, %v825, %v827
        %v829 = vsel %vm285, %v827, %v825
        %830 = vrot.lane.b32.xlu0 %v802, 127
        %v831 = vpop.permute.xlu0 %830
        %832 = vrot.lane.b32.xlu0 %v803, 127
        %v833 = vpop.permute.xlu0 %832
        %v834 = vsel %vm292, %v831, %v833
        %v835 = vsel %vm292, %v833, %v831
        %836 = vrot.lane.b32.xlu0 %v802, 113
        %v837 = vpop.permute.xlu0 %836
        %838 = vrot.lane.b32.xlu0 %v803, 113
        %v839 = vpop.permute.xlu0 %838
        %v840 = vsel %vm299, %v837, %v839
        %v841 = vsel %vm299, %v839, %v837
        %842 = vrot.lane.b32.xlu0 %v802, 112
        %v843 = vpop.permute.xlu0 %842
        %844 = vrot.lane.b32.xlu0 %v803, 112
        %v845 = vpop.permute.xlu0 %844
        %v846 = vsel %vm306, %v843, %v845
        %v847 = vsel %vm306, %v845, %v843
        %848 = vrot.lane.b32.xlu0 %v802, 111
        %v849 = vpop.permute.xlu0 %848
        %850 = vrot.lane.b32.xlu0 %v803, 111
        %v851 = vpop.permute.xlu0 %850
        %v852 = vsel %vm313, %v849, %v851
        %v853 = vsel %vm313, %v851, %v849
        %v856 = vrot.slane %v817, 4
        %v857 = vrot.slane %v816, 4
        %v862 = vrot.slane %v829, 4
        %v863 = vrot.slane %v828, 4
        %v868 = vrot.slane %v834, 4
        %v869 = vrot.slane %v835, 4
        %v874 = vrot.slane %v846, 4
        %v875 = vrot.slane %v847, 4
        %v878 = vsel %vm340, %v811, %v856
        %v879 = vsel %vm340, %v810, %v857
        %v880 = vsel %vm340, %v823, %v862
        %v881 = vsel %vm340, %v822, %v863
        %v882 = vsel %vm340, %v802, %v868
        %v883 = vsel %vm340, %v803, %v869
        %v884 = vsel %vm340, %v840, %v874
        %v885 = vsel %vm340, %v841, %v875
        %v886 = vmul.f32 %v878, %v244
        %v887 = vmul.f32 %v879, %v245
        %v888 = vmul.f32 %v880, %v246
        %v889 = vmul.f32 %v881, %v247
        %v890 = vmul.f32 %v882, %v248
        %v891 = vmul.f32 %v883, %v249
        %v892 = vmul.f32 %v884, %v250
        %v893 = vmul.f32 %v885, %v251
        %v894 = vmul.f32 %v852, %v252
        %v895 = vmul.f32 %v853, %v253
        %v896 = vld [vmem:[%s2] sm:$0xf]
        %898 = vset.pattern.permute.xlu0 3
        %899 = vperm.xlu0 %898, %v896
        %v900 = vpop.permute.xlu0 %899
        %v903 = vsel %vm365, %v805, 0
        %v906 = vsel %vm340, %v894, 0
        %v909 = vsel %vm340, %v895, 0
        %911 = vmatprep.subr.mxu0 %v887
        %912 = vmatpush1.msra.mxu0 %v886
        %913 = vmatprep.subr.mxu0 %v889
        %914 = vmatpush1.msra.mxu0 %v888
        %915 = vmatprep.subr.mxu0 %v891
        %916 = vmatpush1.msra.mxu0 %v890
        %917 = vmatprep.subr.mxu0 %v893
        %918 = vmatpush1.msra.mxu0 %v892
        %919 = vmatprep.subr.mxu0 %v909
        %920 = vmatpush1.msra.mxu0 %v906
        %921 = vmatprep.subr.mxu0 0.0
        %922 = vmatpush1.msra.mxu0 0.0
        %923 = vmatprep.subr.mxu0 0.0
        %924 = vmatpush1.msra.mxu0 0.0
        %925 = vmatprep.subr.mxu0 0.0
        %926 = vmatpush1.msra.mxu0 0.0
        %927 = vmatprep.subr.mxu0 0.0
        %928 = vmatpush1.msra.mxu0 0.0
        %929 = vmatprep.subr.mxu0 0.0
        %930 = vmatpush1.msra.mxu0 0.0
        %931 = vmatprep.subr.mxu0 0.0
        %932 = vmatpush1.msra.mxu0 0.0
        %933 = vmatprep.subr.mxu0 0.0
        %934 = vmatpush1.msra.mxu0 0.0
        %935 = vmatprep.subr.mxu0 0.0
        %936 = vmatpush1.msra.mxu0 0.0
        %937 = vmatprep.subr.mxu0 0.0
        %938 = vmatpush1.msra.mxu0 0.0
        %939 = vmatprep.subr.mxu0 0.0
        %940 = vmatpush1.msra.mxu0 0.0
        %941 = vmatprep.subr.mxu0 0.0
        %942 = vmatpush1.msra.mxu0 0.0
        %943 = vmatprep.subr.mxu0 0.0
        %944 = vmatpush1.msra.mxu0 0.0
        %945 = vmatprep.subr.mxu0 0.0
        %946 = vmatpush1.msra.mxu0 0.0
        %947 = vmatprep.subr.mxu0 0.0
        %948 = vmatpush1.msra.mxu0 0.0
        %949 = vmatprep.subr.mxu0 0.0
        %950 = vmatpush1.msra.mxu0 0.0
        %951 = vmatprep.subr.mxu0 0.0
        %952 = vmatpush1.msra.mxu0 0.0
        %953 = vmatprep.subr.mxu0 0.0
        %954 = vmatpush1.msra.mxu0 0.0
        %955 = vmatprep.subr.mxu0 0.0
        %956 = vmatpush1.msra.mxu0 0.0
        %957 = vmatprep.subr.mxu0 0.0
        %958 = vmatpush1.msra.mxu0 0.0
        %959 = vmatprep.subr.mxu0 0.0
        %960 = vmatpush1.msra.mxu0 0.0
        %961 = vmatprep.subr.mxu0 0.0
        %962 = vmatpush1.msra.mxu0 0.0
        %963 = vmatprep.subr.mxu0 0.0
        %964 = vmatpush1.msra.mxu0 0.0
        %965 = vmatprep.subr.mxu0 0.0
        %966 = vmatpush1.msra.mxu0 0.0
        %967 = vmatprep.subr.mxu0 0.0
        %968 = vmatpush1.msra.mxu0 0.0
        %969 = vmatprep.subr.mxu0 0.0
        %970 = vmatpush1.msra.mxu0 0.0
        %971 = vmatprep.subr.mxu0 0.0
        %972 = vmatpush1.msra.mxu0 0.0
        %973 = vmatprep.subr.mxu0 0.0
        %974 = vmatpush1.msra.mxu0 0.0
        %975 = vmatprep.mubr.f32.mxu0 0.0
        %976 = vmatmul.mubr.f32.gmra.mrb[0].mxu0 %v903
        %v977 = vpop.f32.mrb[0].mxu0
        %v978 = vadd.f32 %v900, %v977
        %v979 = vpop.f32.mrb[0].mxu0
        %v980 = vadd.f32 %v900, %v979
        %981 = vdwg.mxu0
        %v982 = vmax.f32 %v978, 0.0
        %v983 = vmax.f32 %v980, 0.0
        %s984 = scalar_lea.vmem [#allocation5], 16
        %v985 = vld [vmem:[%s984] sm:$0xf]
        %986 = vrot.lane.b32.xlu0 %v982, 17
        %v987 = vpop.permute.xlu0 %986
        %988 = vrot.lane.b32.xlu0 %v983, 17
        %v989 = vpop.permute.xlu0 %988
        %v990 = vsel %vm264, %v987, %v989
        %v991 = vsel %vm264, %v989, %v987
        %992 = vrot.lane.b32.xlu0 %v982, 16
        %v993 = vpop.permute.xlu0 %992
        %994 = vrot.lane.b32.xlu0 %v983, 16
        %v995 = vpop.permute.xlu0 %994
        %v996 = vsel %vm271, %v993, %v995
        %v997 = vsel %vm271, %v995, %v993
        %998 = vrot.lane.b32.xlu0 %v982, 15
        %v999 = vpop.permute.xlu0 %998
        %1000 = vrot.lane.b32.xlu0 %v983, 15
        %v1001 = vpop.permute.xlu0 %1000
        %v1002 = vsel %vm278, %v999, %v1001
        %v1003 = vsel %vm278, %v1001, %v999
        %1004 = vrot.lane.b32.xlu0 %v982, 1
        %v1005 = vpop.permute.xlu0 %1004
        %1006 = vrot.lane.b32.xlu0 %v983, 1
        %v1007 = vpop.permute.xlu0 %1006
        %v1008 = vsel %vm285, %v1005, %v1007
        %v1009 = vsel %vm285, %v1007, %v1005
        %1010 = vrot.lane.b32.xlu0 %v982, 127
        %v1011 = vpop.permute.xlu0 %1010
        %1012 = vrot.lane.b32.xlu0 %v983, 127
        %v1013 = vpop.permute.xlu0 %1012
        %v1014 = vsel %vm292, %v1011, %v1013
        %v1015 = vsel %vm292, %v1013, %v1011
        %1016 = vrot.lane.b32.xlu0 %v982, 113
        %v1017 = vpop.permute.xlu0 %1016
        %1018 = vrot.lane.b32.xlu0 %v983, 113
        %v1019 = vpop.permute.xlu0 %1018
        %v1020 = vsel %vm299, %v1017, %v1019
        %v1021 = vsel %vm299, %v1019, %v1017
        %1022 = vrot.lane.b32.xlu0 %v982, 112
        %v1023 = vpop.permute.xlu0 %1022
        %1024 = vrot.lane.b32.xlu0 %v983, 112
        %v1025 = vpop.permute.xlu0 %1024
        %v1026 = vsel %vm306, %v1023, %v1025
        %v1027 = vsel %vm306, %v1025, %v1023
        %1028 = vrot.lane.b32.xlu0 %v982, 111
        %v1029 = vpop.permute.xlu0 %1028
        %1030 = vrot.lane.b32.xlu0 %v983, 111
        %v1031 = vpop.permute.xlu0 %1030
        %v1032 = vsel %vm313, %v1029, %v1031
        %v1033 = vsel %vm313, %v1031, %v1029
        %v1036 = vrot.slane %v997, 4
        %v1037 = vrot.slane %v996, 4
        %v1042 = vrot.slane %v1009, 4
        %v1043 = vrot.slane %v1008, 4
        %v1048 = vrot.slane %v1014, 4
        %v1049 = vrot.slane %v1015, 4
        %v1054 = vrot.slane %v1026, 4
        %v1055 = vrot.slane %v1027, 4
        %v1058 = vsel %vm340, %v991, %v1036
        %v1059 = vsel %vm340, %v990, %v1037
        %v1060 = vsel %vm340, %v1003, %v1042
        %v1061 = vsel %vm340, %v1002, %v1043
        %v1062 = vsel %vm340, %v982, %v1048
        %v1063 = vsel %vm340, %v983, %v1049
        %v1064 = vsel %vm340, %v1020, %v1054
        %v1065 = vsel %vm340, %v1021, %v1055
        %v1066 = vmul.f32 %v1058, %v244
        %v1067 = vmul.f32 %v1059, %v245
        %v1068 = vmul.f32 %v1060, %v246
        %v1069 = vmul.f32 %v1061, %v247
        %v1070 = vmul.f32 %v1062, %v248
        %v1071 = vmul.f32 %v1063, %v249
        %v1072 = vmul.f32 %v1064, %v250
        %v1073 = vmul.f32 %v1065, %v251
        %v1074 = vmul.f32 %v1032, %v252
        %v1075 = vmul.f32 %v1033, %v253
        %1076 = vset.pattern.permute.xlu0 4
        %1077 = vperm.xlu0 %1076, %v896
        %v1078 = vpop.permute.xlu0 %1077
        %v1081 = vsel %vm365, %v985, 0
        %v1084 = vsel %vm340, %v1074, 0
        %v1087 = vsel %vm340, %v1075, 0
        %1089 = vmatprep.subr.mxu0 %v1067
        %1090 = vmatpush1.msra.mxu0 %v1066
        %1091 = vmatprep.subr.mxu0 %v1069
        %1092 = vmatpush1.msra.mxu0 %v1068
        %1093 = vmatprep.subr.mxu0 %v1071
        %1094 = vmatpush1.msra.mxu0 %v1070
        %1095 = vmatprep.subr.mxu0 %v1073
        %1096 = vmatpush1.msra.mxu0 %v1072
        %1097 = vmatprep.subr.mxu0 %v1087
        %1098 = vmatpush1.msra.mxu0 %v1084
        %1099 = vmatprep.subr.mxu0 0.0
        %1100 = vmatpush1.msra.mxu0 0.0
        %1101 = vmatprep.subr.mxu0 0.0
        %1102 = vmatpush1.msra.mxu0 0.0
        %1103 = vmatprep.subr.mxu0 0.0
        %1104 = vmatpush1.msra.mxu0 0.0
        %1105 = vmatprep.subr.mxu0 0.0
        %1106 = vmatpush1.msra.mxu0 0.0
        %1107 = vmatprep.subr.mxu0 0.0
        %1108 = vmatpush1.msra.mxu0 0.0
        %1109 = vmatprep.subr.mxu0 0.0
        %1110 = vmatpush1.msra.mxu0 0.0
        %1111 = vmatprep.subr.mxu0 0.0
        %1112 = vmatpush1.msra.mxu0 0.0
        %1113 = vmatprep.subr.mxu0 0.0
        %1114 = vmatpush1.msra.mxu0 0.0
        %1115 = vmatprep.subr.mxu0 0.0
        %1116 = vmatpush1.msra.mxu0 0.0
        %1117 = vmatprep.subr.mxu0 0.0
        %1118 = vmatpush1.msra.mxu0 0.0
        %1119 = vmatprep.subr.mxu0 0.0
        %1120 = vmatpush1.msra.mxu0 0.0
        %1121 = vmatprep.subr.mxu0 0.0
        %1122 = vmatpush1.msra.mxu0 0.0
        %1123 = vmatprep.subr.mxu0 0.0
        %1124 = vmatpush1.msra.mxu0 0.0
        %1125 = vmatprep.subr.mxu0 0.0
        %1126 = vmatpush1.msra.mxu0 0.0
        %1127 = vmatprep.subr.mxu0 0.0
        %1128 = vmatpush1.msra.mxu0 0.0
        %1129 = vmatprep.subr.mxu0 0.0
        %1130 = vmatpush1.msra.mxu0 0.0
        %1131 = vmatprep.subr.mxu0 0.0
        %1132 = vmatpush1.msra.mxu0 0.0
        %1133 = vmatprep.subr.mxu0 0.0
        %1134 = vmatpush1.msra.mxu0 0.0
        %1135 = vmatprep.subr.mxu0 0.0
        %1136 = vmatpush1.msra.mxu0 0.0
        %1137 = vmatprep.subr.mxu0 0.0
        %1138 = vmatpush1.msra.mxu0 0.0
        %1139 = vmatprep.subr.mxu0 0.0
        %1140 = vmatpush1.msra.mxu0 0.0
        %1141 = vmatprep.subr.mxu0 0.0
        %1142 = vmatpush1.msra.mxu0 0.0
        %1143 = vmatprep.subr.mxu0 0.0
        %1144 = vmatpush1.msra.mxu0 0.0
        %1145 = vmatprep.subr.mxu0 0.0
        %1146 = vmatpush1.msra.mxu0 0.0
        %1147 = vmatprep.subr.mxu0 0.0
        %1148 = vmatpush1.msra.mxu0 0.0
        %1149 = vmatprep.subr.mxu0 0.0
        %1150 = vmatpush1.msra.mxu0 0.0
        %1151 = vmatprep.subr.mxu0 0.0
        %1152 = vmatpush1.msra.mxu0 0.0
        %1153 = vmatprep.mubr.f32.mxu0 0.0
        %1154 = vmatmul.mubr.f32.gmra.mrb[0].mxu0 %v1081
        %v1155 = vpop.f32.mrb[0].mxu0
        %v1156 = vadd.f32 %v1078, %v1155
        %v1157 = vpop.f32.mrb[0].mxu0
        %v1158 = vadd.f32 %v1078, %v1157
        %1159 = vdwg.mxu0
        %v1160 = vmax.f32 %v1156, 0.0
        %v1161 = vmax.f32 %v1158, 0.0
        %s1162 = scalar_lea.vmem [#allocation5], 20
        %v1163 = vld [vmem:[%s1162] sm:$0xf]
        %1164 = vrot.lane.b32.xlu0 %v1160, 17
        %v1165 = vpop.permute.xlu0 %1164
        %1166 = vrot.lane.b32.xlu0 %v1161, 17
        %v1167 = vpop.permute.xlu0 %1166
        %v1168 = vsel %vm264, %v1165, %v1167
        %v1169 = vsel %vm264, %v1167, %v1165
        %1170 = vrot.lane.b32.xlu0 %v1160, 16
        %v1171 = vpop.permute.xlu0 %1170
        %1172 = vrot.lane.b32.xlu0 %v1161, 16
        %v1173 = vpop.permute.xlu0 %1172
        %v1174 = vsel %vm271, %v1171, %v1173
        %v1175 = vsel %vm271, %v1173, %v1171
        %1176 = vrot.lane.b32.xlu0 %v1160, 15
        %v1177 = vpop.permute.xlu0 %1176
        %1178 = vrot.lane.b32.xlu0 %v1161, 15
        %v1179 = vpop.permute.xlu0 %1178
        %v1180 = vsel %vm278, %v1177, %v1179
        %v1181 = vsel %vm278, %v1179, %v1177
        %1182 = vrot.lane.b32.xlu0 %v1160, 1
        %v1183 = vpop.permute.xlu0 %1182
        %1184 = vrot.lane.b32.xlu0 %v1161, 1
        %v1185 = vpop.permute.xlu0 %1184
        %v1186 = vsel %vm285, %v1183, %v1185
        %v1187 = vsel %vm285, %v1185, %v1183
        %1188 = vrot.lane.b32.xlu0 %v1160, 127
        %v1189 = vpop.permute.xlu0 %1188
        %1190 = vrot.lane.b32.xlu0 %v1161, 127
        %v1191 = vpop.permute.xlu0 %1190
        %v1192 = vsel %vm292, %v1189, %v1191
        %v1193 = vsel %vm292, %v1191, %v1189
        %1194 = vrot.lane.b32.xlu0 %v1160, 113
        %v1195 = vpop.permute.xlu0 %1194
        %1196 = vrot.lane.b32.xlu0 %v1161, 113
        %v1197 = vpop.permute.xlu0 %1196
        %v1198 = vsel %vm299, %v1195, %v1197
        %v1199 = vsel %vm299, %v1197, %v1195
        %1200 = vrot.lane.b32.xlu0 %v1160, 112
        %v1201 = vpop.permute.xlu0 %1200
        %1202 = vrot.lane.b32.xlu0 %v1161, 112
        %v1203 = vpop.permute.xlu0 %1202
        %v1204 = vsel %vm306, %v1201, %v1203
        %v1205 = vsel %vm306, %v1203, %v1201
        %1206 = vrot.lane.b32.xlu0 %v1160, 111
        %v1207 = vpop.permute.xlu0 %1206
        %1208 = vrot.lane.b32.xlu0 %v1161, 111
        %v1209 = vpop.permute.xlu0 %1208
        %v1210 = vsel %vm313, %v1207, %v1209
        %v1211 = vsel %vm313, %v1209, %v1207
        %v1214 = vrot.slane %v1175, 4
        %v1215 = vrot.slane %v1174, 4
        %v1220 = vrot.slane %v1187, 4
        %v1221 = vrot.slane %v1186, 4
        %v1226 = vrot.slane %v1192, 4
        %v1227 = vrot.slane %v1193, 4
        %v1232 = vrot.slane %v1204, 4
        %v1233 = vrot.slane %v1205, 4
        %v1236 = vsel %vm340, %v1169, %v1214
        %v1237 = vsel %vm340, %v1168, %v1215
        %v1238 = vsel %vm340, %v1181, %v1220
        %v1239 = vsel %vm340, %v1180, %v1221
        %v1240 = vsel %vm340, %v1160, %v1226
        %v1241 = vsel %vm340, %v1161, %v1227
        %v1242 = vsel %vm340, %v1198, %v1232
        %v1243 = vsel %vm340, %v1199, %v1233
        %v1244 = vmul.f32 %v1236, %v244
        %v1245 = vmul.f32 %v1237, %v245
        %v1246 = vmul.f32 %v1238, %v246
        %v1247 = vmul.f32 %v1239, %v247
        %v1248 = vmul.f32 %v1240, %v248
        %v1249 = vmul.f32 %v1241, %v249
        %v1250 = vmul.f32 %v1242, %v250
        %v1251 = vmul.f32 %v1243, %v251
        %v1252 = vmul.f32 %v1210, %v252
        %v1253 = vmul.f32 %v1211, %v253
        %1254 = vset.pattern.permute.xlu0 5
        %1255 = vperm.xlu0 %1254, %v896
        %v1256 = vpop.permute.xlu0 %1255
        %v1259 = vsel %vm365, %v1163, 0
        %v1262 = vsel %vm340, %v1252, 0
        %v1265 = vsel %vm340, %v1253, 0
        %1267 = vmatprep.subr.mxu0 %v1245
        %1268 = vmatpush1.msra.mxu0 %v1244
        %1269 = vmatprep.subr.mxu0 %v1247
        %1270 = vmatpush1.msra.mxu0 %v1246
        %1271 = vmatprep.subr.mxu0 %v1249
        %1272 = vmatpush1.msra.mxu0 %v1248
        %1273 = vmatprep.subr.mxu0 %v1251
        %1274 = vmatpush1.msra.mxu0 %v1250
        %1275 = vmatprep.subr.mxu0 %v1265
        %1276 = vmatpush1.msra.mxu0 %v1262
        %1277 = vmatprep.subr.mxu0 0.0
        %1278 = vmatpush1.msra.mxu0 0.0
        %1279 = vmatprep.subr.mxu0 0.0
        %1280 = vmatpush1.msra.mxu0 0.0
        %1281 = vmatprep.subr.mxu0 0.0
        %1282 = vmatpush1.msra.mxu0 0.0
        %1283 = vmatprep.subr.mxu0 0.0
        %1284 = vmatpush1.msra.mxu0 0.0
        %1285 = vmatprep.subr.mxu0 0.0
        %1286 = vmatpush1.msra.mxu0 0.0
        %1287 = vmatprep.subr.mxu0 0.0
        %1288 = vmatpush1.msra.mxu0 0.0
        %1289 = vmatprep.subr.mxu0 0.0
        %1290 = vmatpush1.msra.mxu0 0.0
        %1291 = vmatprep.subr.mxu0 0.0
        %1292 = vmatpush1.msra.mxu0 0.0
        %1293 = vmatprep.subr.mxu0 0.0
        %1294 = vmatpush1.msra.mxu0 0.0
        %1295 = vmatprep.subr.mxu0 0.0
        %1296 = vmatpush1.msra.mxu0 0.0
        %1297 = vmatprep.subr.mxu0 0.0
        %1298 = vmatpush1.msra.mxu0 0.0
        %1299 = vmatprep.subr.mxu0 0.0
        %1300 = vmatpush1.msra.mxu0 0.0
        %1301 = vmatprep.subr.mxu0 0.0
        %1302 = vmatpush1.msra.mxu0 0.0
        %1303 = vmatprep.subr.mxu0 0.0
        %1304 = vmatpush1.msra.mxu0 0.0
        %1305 = vmatprep.subr.mxu0 0.0
        %1306 = vmatpush1.msra.mxu0 0.0
        %1307 = vmatprep.subr.mxu0 0.0
        %1308 = vmatpush1.msra.mxu0 0.0
        %1309 = vmatprep.subr.mxu0 0.0
        %1310 = vmatpush1.msra.mxu0 0.0
        %1311 = vmatprep.subr.mxu0 0.0
        %1312 = vmatpush1.msra.mxu0 0.0
        %1313 = vmatprep.subr.mxu0 0.0
        %1314 = vmatpush1.msra.mxu0 0.0
        %1315 = vmatprep.subr.mxu0 0.0
        %1316 = vmatpush1.msra.mxu0 0.0
        %1317 = vmatprep.subr.mxu0 0.0
        %1318 = vmatpush1.msra.mxu0 0.0
        %1319 = vmatprep.subr.mxu0 0.0
        %1320 = vmatpush1.msra.mxu0 0.0
        %1321 = vmatprep.subr.mxu0 0.0
        %1322 = vmatpush1.msra.mxu0 0.0
        %1323 = vmatprep.subr.mxu0 0.0
        %1324 = vmatpush1.msra.mxu0 0.0
        %1325 = vmatprep.subr.mxu0 0.0
        %1326 = vmatpush1.msra.mxu0 0.0
        %1327 = vmatprep.subr.mxu0 0.0
        %1328 = vmatpush1.msra.mxu0 0.0
        %1329 = vmatprep.subr.mxu0 0.0
        %1330 = vmatpush1.msra.mxu0 0.0
        %1331 = vmatprep.mubr.f32.mxu0 0.0
        %1332 = vmatmul.mubr.f32.gmra.mrb[0].mxu0 %v1259
        %v1333 = vpop.f32.mrb[0].mxu0
        %v1334 = vadd.f32 %v1256, %v1333
        %v1335 = vpop.f32.mrb[0].mxu0
        %v1336 = vadd.f32 %v1256, %v1335
        %1337 = vdwg.mxu0
        %v1338 = vadd.f32 %v1334, %v802
        %v1339 = vadd.f32 %v1336, %v803
        %v1340 = vadd.f32 %v1338, %v243
        %v1341 = vadd.f32 %v1339, %v256
        %v1344 = vcombine.low %v1340, %v1341
        %1346 = vst [vmem:[%s242] sm:$0xff] %v1344
        %s1347 = sand.u32 %s119, 1
        %s1348 = scalar_lea.sflag [#allocation4], %s1347
        %s1349 = sand.u32 %s119, 1
        %s1350 = smul.addr %s1349, 8
        %s1351 = scalar_lea.vmem [#allocation8], %s1350
        // Predicated region
        $region49: #{tpu_custom_call.1} parent=35 // pred_check
          %p1352 = pneg %p129
        $region50: #{tpu_custom_call.1} parent=35 // pred_check_branch
          %1354 = sbr.rel (%p1352) target = $region52
        $region51: #{tpu_custom_call.1} parent=35 // pred_region
          %s1356 = ssub.s32 128, 128
          %1357 = vsyncadd %s1348, %s1356
          %s1358 = smul.addr %s22, 2
          %s1359 = smul.addr %s1358, 64
          %s1360 = scalar_lea.hbm %s4, %s1359
          %s1362 = sshll.u32 %s1351, 4
          %s1363 = int_to_ptr.vmem [resolvable:$true] %s1362
          %1365 = dma.vmem_to_hbm [thread:$0]  %s1363, 128, %s1360, %s1348
        $region52: #{tpu_custom_call.1} parent=35 // pred_fallthru
          _
      $region36: #{tpu_custom_call.1} parent=5 // pred_fallthru
        _
      %p1366 = scmp.le.s32.totalorder 2, %s17
      // Predicated region
      $region53: #{tpu_custom_call.1} parent=5 // pred_check
        %p1367 = pneg %p1366
      $region54: #{tpu_custom_call.1} parent=5 // pred_check_branch
        %1369 = sbr.rel (%p1367) target = $region56
      $region55: #{tpu_custom_call.1} parent=5 // pred_region
        %s1370 = ssub.s32 %s17, 2
        // Predicated region
        $region57: #{tpu_custom_call.1} parent=55 // pred_check
          %p1371 = pneg %p135
        $region58: #{tpu_custom_call.1} parent=55 // pred_check_branch
          %1373 = sbr.rel (%p1371) target = $region60
        $region59: #{tpu_custom_call.1} parent=55 // pred_region
          %s1374 = sand.u32 %s120, 1
          %s1375 = scalar_lea.sflag [#allocation4], %s1374
          %s1376 = sand.u32 %s120, 1
          %s1377 = smul.addr %s1376, 8
          %s1378 = scalar_lea.vmem [#allocation8], %s1377
          %1379 = dma.done %s1375, 128
        $region60: #{tpu_custom_call.1} parent=55 // pred_fallthru
          _
      $region56: #{tpu_custom_call.1} parent=5 // pred_fallthru
        _
    $region6: #{tpu_custom_call.1} parent=1 // loop_footer
      %s21 = sadd.s32 1, %s17
    $region7: #{tpu_custom_call.1} parent=1 // loop_footer_branch
      %16 = sbr.rel target = $region3
    $region8: #{tpu_custom_call.1} parent=1 // loop_exit
      _
    %1380 = vsyncpa [#allocation3], 1
    %s1381 = scalar_lea.sflag [#allocation3], 1
    %1382 = vsyncpa %s1381, 1
    %1383 = vsyncpa [#allocation6], 1
    %1384 = vsyncpa [#allocation4], 1
    %s1385 = scalar_lea.sflag [#allocation4], 1
    %1386 = vsyncpa %s1385, 1

</llo_original>
